<compile_context>
chip_gen: v7x
topology: tpu7x:2x2x1
jax: 0.10.0
libtpu: 0.0.40
codegen_flags: <defaults>
</compile_context>

<pallas_src>
import functools

import jax
import jax.numpy as jnp
import numpy as np
from jax.experimental import pallas as pl
from jax.experimental.pallas import tpu as pltpu


# ----------------------------------------------------------------------------
# Fused Pallas kernel: every (reflect-pad conv3x3 -> batchnorm -> relu) layer,
# activations resident in VMEM in the lane-dense (N, H, W*C) layout.
# ----------------------------------------------------------------------------
def convblock_kernel(*refs, N, H, W, layer_meta, eps):
    """refs = (x_ref, [m0, m1, m2, pmat, gamma_t, beta_t] * n_layers, out_ref).

    x_ref    : (N, H, W*C0) f32, lane axis = fused (W, C), channel fastest.
    m_kh     : (W*Cin, W*Cout) bf16 banded block-Toeplitz conv matrix for one
               vertical tap kh (encodes W reflect pad + channel mixing).
    pmat     : (W*Cout, W*Cout) f32, P[i,j] = 1/W if i%Cout == j%Cout
               (per-channel average + broadcast over the fused lane axis).
    gamma_t, beta_t : (1, W*Cout) f32, BN affine params pre-tiled over W.
    out_ref  : (N*H, W*Cout_last) f32, lane-dense (W*Cout_last % 128 == 0).
    layer_meta: tuple of (cin, cout, apply_relu) per layer (static).
    """
    x_ref, out_ref = refs[0], refs[-1]
    layer_refs = refs[1:-1]
    n_layers = len(layer_meta)

    act = x_ref[...]  # (N, H, W*C0) f32; stays in VMEM for the whole block
    for li, (cin, cout, relu) in enumerate(layer_meta):
        m_refs = layer_refs[6 * li: 6 * li + 3]
        p_ref, g_ref, b_ref = layer_refs[6 * li + 3: 6 * li + 6]
        wc_in, wc_out = W * cin, W * cout

        # Reflect padding in H only (pad=1): two sublane-row copies per image.
        # The lane axis is untouched; the W-direction reflect pad lives inside
        # the Toeplitz weight matrices.
        pad = jnp.concatenate([act[:, 1:2], act, act[:, H - 2:H - 1]], axis=1)

        # Conv3x3 as 3 row-shifted matmuls (one per vertical tap):
        # bf16 operands, f32 accumulation.  No im2col patch materialization.
        acc = None
        for kh in range(3):
            s = pad[:, kh:kh + H].reshape(N * H, wc_in)   # leading-dim collapse
            d = jnp.dot(s.astype(jnp.bfloat16), m_refs[kh][...],
                        preferred_element_type=jnp.float32)
            acc = d if acc is None else acc + d           # (N*H, W*Cout) f32

        # BatchNorm2d training-mode batch stats over (N,H,W), biased variance,
        # computed centered.  Cross-W channel reduce / broadcast is one tiny
        # f32 matmul against pmat (no lane-dim reshapes in the kernel).
        row_mean = jnp.mean(acc, axis=0, keepdims=True)               # (1, W*Cout)
        mean_full = jnp.dot(row_mean, p_ref[...],
                            preferred_element_type=jnp.float32)       # channel mean, tiled over W
        diff = acc - mean_full
        row_var = jnp.mean(diff * diff, axis=0, keepdims=True)        # (1, W*Cout)
        var_full = jnp.dot(row_var, p_ref[...],
                           preferred_element_type=jnp.float32)        # channel var (>= 0), tiled over W

        # Conv bias intentionally omitted: BN's mean subtraction cancels a
        # per-channel bias exactly (norm='batch', training forward only).
        scale = g_ref[...] * jax.lax.rsqrt(var_full + eps)             # EUP rsqrt
        shift = b_ref[...] - mean_full * scale
        y = acc * scale + shift
        if relu:
            y = jnp.maximum(y, 0.0)

        if li == n_layers - 1:
            out_ref[...] = y          # full-lane f32 store, W*Cout % 128 == 0
        else:
            act = y.reshape(N, H, wc_out)


# ----------------------------------------------------------------------------
# Host-side construction of the banded Toeplitz conv matrices
# ----------------------------------------------------------------------------
def _w_reflect_taps(W):
    """S[kw, w_in, w_out] = 1 iff input column w_in feeds output column w_out
    through horizontal tap kw under reflect padding (pad=1)."""
    S = np.zeros((3, W, W), np.float32)
    for w_out in range(W):
        for kw in range(3):
            w_in = w_out + kw - 1
            if w_in < 0:
                w_in = -w_in                    # reflect: -1 -> 1
            elif w_in >= W:
                w_in = 2 * (W - 1) - w_in       # reflect:  W -> W-2
            S[kw, w_in, w_out] = 1.0
    return S


# ----------------------------------------------------------------------------
# Wrapper: NCHW in / NCHW out, one pallas_call for the whole ConvBlock
# ----------------------------------------------------------------------------
def conv_block_forward(x_nchw, params, last_relu=True):
    N, C0, H, W = x_nchw.shape
    assert H >= 2 and W >= 2, "reflect padding with pad=1 needs H,W >= 2"

    n_layers = len(params)
    c_last = params[-1][0].shape[3]
    # Lane-dense output store requirement (full-lane vst, no masked stores).
    assert (W * c_last) % 128 == 0, (W, c_last)

    # NCHW -> lane-dense (N, H, W*C) f32, channel fastest on the lane axis.
    x = jnp.transpose(x_nchw, (0, 2, 3, 1)).astype(jnp.float32)
    x = x.reshape(N, H, W * C0)

    S = jnp.asarray(_w_reflect_taps(W))                    # (3, W, W), static

    layer_meta = []
    flat_inputs = [x]
    for i, (w, _b, gamma, beta) in enumerate(params):
        cin, cout = w.shape[2], w.shape[3]
        relu = last_relu or (i < n_layers - 1)
        layer_meta.append((cin, cout, relu))

        # Banded block-Toeplitz conv matrices, one per vertical tap kh:
        #   M_kh[w_in*Cin+ci, w_out*Cout+co] = sum_{kw feeding w_in->w_out} w[kh,kw,ci,co]
        for kh in range(3):
            m = jnp.einsum('kiw,kco->icwo', S, w[kh].astype(jnp.float32))
            flat_inputs.append(m.reshape(W * cin, W * cout).astype(jnp.bfloat16))

        # Per-channel averaging / broadcast matrix over the fused (W,C) lanes.
        pmat = np.tile(np.eye(cout, dtype=np.float32), (W, W)) / float(W)
        flat_inputs.append(jnp.asarray(pmat))
        # BN affine params pre-tiled over W (no in-kernel broadcasts/reshapes).
        flat_inputs.append(jnp.tile(gamma.reshape(1, cout).astype(jnp.float32), (1, W)))
        flat_inputs.append(jnp.tile(beta.reshape(1, cout).astype(jnp.float32), (1, W)))

    kernel = functools.partial(convblock_kernel, N=N, H=H, W=W,
                               layer_meta=tuple(layer_meta), eps=1e-5)
    vmem = pl.BlockSpec(memory_space=pltpu.MemorySpace.VMEM)
    # Grid-less whole-VMEM design (~0.3 MiB of activations + weights at the
    # test shapes); see TODOs at top for the tiled / two-pass-BN rewrite.
    out2d = pl.pallas_call(
        kernel,
        out_shape=jax.ShapeDtypeStruct((N * H, W * c_last), jnp.float32),
        in_specs=[vmem] * len(flat_inputs),
        out_specs=vmem,
        compiler_params=pltpu.CompilerParams(
            vmem_limit_bytes=32 * 1024 * 1024),
    )(*flat_inputs)

    # (N*H, W*C) -> NHWC -> NCHW (views / one cheap transpose in XLA)
    out = out2d.reshape(N, H, W, c_last)
    return jnp.transpose(out, (0, 3, 1, 2))


# ----------------------------------------------------------------------------
# Parameter init (matches PyTorch Conv2d/BatchNorm2d defaults)
# ----------------------------------------------------------------------------
def init_conv_block_params(key, nkernels):
    params = []
    for i in range(len(nkernels) - 1):
        cin, cout = nkernels[i], nkernels[i + 1]
        key, kw, kb = jax.random.split(key, 3)
        fan_in = cin * 9
        bound = 1.0 / jnp.sqrt(fan_in)
        w = jax.random.uniform(kw, (3, 3, cin, cout), jnp.float32, -bound, bound)
        b = jax.random.uniform(kb, (cout,), jnp.float32, -bound, bound)
        gamma = jnp.ones((cout,), jnp.float32)
        beta = jnp.zeros((cout,), jnp.float32)
        params.append((w, b, gamma, beta))
    return params


# ----------------------------------------------------------------------------
# Pure-JAX reference (keeps the conv bias; same bf16-input / f32-accumulate
# matmul regime as the kernel so the comparison is tight)
# ----------------------------------------------------------------------------
def reference_forward(x_nchw, params, last_relu=True):
    x = jnp.transpose(x_nchw, (0, 2, 3, 1)).astype(jnp.float32)
    n_layers = len(params)
    for i, (w, b, gamma, beta) in enumerate(params):
        xpad = jnp.pad(x, ((0, 0), (1, 1), (1, 1), (0, 0)), mode='reflect')
        y = jax.lax.conv_general_dilated(
            xpad.astype(jnp.bfloat16), w.astype(jnp.bfloat16), (1, 1), 'VALID',
            dimension_numbers=('NHWC', 'HWIO', 'NHWC'),
            preferred_element_type=jnp.float32) + b
        mean = jnp.mean(y, axis=(0, 1, 2))
        var = jnp.mean((y - mean) ** 2, axis=(0, 1, 2))
        y = (y - mean) * jax.lax.rsqrt(var + 1e-5) * gamma + beta
        if last_relu or (i < n_layers - 1):
            y = jnp.maximum(y, 0.0)
        x = y
    return jnp.transpose(x, (0, 3, 1, 2))


if __name__ == "__main__":
    key = jax.random.PRNGKey(0)
    k_x, k_p = jax.random.split(key)

    # ConvBlock(nkernels=[4, 8, 8], norm='batch', last_relu=True)
    nkernels = [4, 8, 8]
    x = jax.random.normal(k_x, (2, 4, 16, 16), jnp.float32)  # NCHW, like PyTorch
    params = init_conv_block_params(k_p, nkernels)

    out = jax.block_until_ready(conv_block_forward(x, params, last_relu=True))
    ref = jax.block_until_ready(reference_forward(x, params, last_relu=True))

    assert out.shape == (2, 8, 16, 16), out.shape
    assert jnp.allclose(out, ref, atol=2e-2, rtol=2e-2), \
        float(jnp.max(jnp.abs(out - ref)))

    print("KERNEL_OK")
</pallas_src>

<mosaic_0001>
module attributes {stable_mosaic.version = 11 : i64} {
  func.func @convblock_kernel(%arg0: memref<2x16x64xf32, #tpu.memory_space<vmem>>, %arg1: memref<64x128xbf16, #tpu.memory_space<vmem>>, %arg2: memref<64x128xbf16, #tpu.memory_space<vmem>>, %arg3: memref<64x128xbf16, #tpu.memory_space<vmem>>, %arg4: memref<128x128xf32, #tpu.memory_space<vmem>>, %arg5: memref<1x128xf32, #tpu.memory_space<vmem>>, %arg6: memref<1x128xf32, #tpu.memory_space<vmem>>, %arg7: memref<128x128xbf16, #tpu.memory_space<vmem>>, %arg8: memref<128x128xbf16, #tpu.memory_space<vmem>>, %arg9: memref<128x128xbf16, #tpu.memory_space<vmem>>, %arg10: memref<128x128xf32, #tpu.memory_space<vmem>>, %arg11: memref<1x128xf32, #tpu.memory_space<vmem>>, %arg12: memref<1x128xf32, #tpu.memory_space<vmem>>, %arg13: memref<32x128xf32, #tpu.memory_space<vmem>>) attributes {dimension_semantics = [], scalar_prefetch = 0 : i64, scratch_operands = 0 : i64, tpu.core_type = #tpu.core_type<tc>} {
    %c0 = arith.constant 0 : index
    %c0_0 = arith.constant 0 : index
    %c0_1 = arith.constant 0 : index
    %0 = vector.load %arg0[%c0, %c0_0, %c0_1] : memref<2x16x64xf32, #tpu.memory_space<vmem>>, vector<2x16x64xf32>
    %1 = vector.extract_strided_slice %0 {offsets = [0, 1, 0], sizes = [2, 1, 64], strides = [1, 1, 1]} : vector<2x16x64xf32> to vector<2x1x64xf32>
    %2 = vector.extract_strided_slice %0 {offsets = [0, 14, 0], sizes = [2, 1, 64], strides = [1, 1, 1]} : vector<2x16x64xf32> to vector<2x1x64xf32>
    %3 = tpu.concatenate %1, %0, %2 in 1 : vector<2x1x64xf32>, vector<2x16x64xf32>, vector<2x1x64xf32> -> vector<2x18x64xf32>
    %4 = vector.extract_strided_slice %3 {offsets = [0, 0, 0], sizes = [2, 16, 64], strides = [1, 1, 1]} : vector<2x18x64xf32> to vector<2x16x64xf32>
    %5 = vector.shape_cast %4 : vector<2x16x64xf32> to vector<32x64xf32>
    %6 = arith.truncf %5 : vector<32x64xf32> to vector<32x64xbf16>
    %c0_2 = arith.constant 0 : index
    %c0_3 = arith.constant 0 : index
    %7 = vector.load %arg1[%c0_2, %c0_3] : memref<64x128xbf16, #tpu.memory_space<vmem>>, vector<64x128xbf16>
    %cst = arith.constant dense<0.000000e+00> : vector<32x128xf32>
    %8 = tpu.matmul %6, %7, %cst {dimension_numbers = #tpu.dot_dimension_numbers<[1], [0], [0], [1], [0, 0, 1, 1], [], []>} : vector<32x64xbf16>, vector<64x128xbf16>, vector<32x128xf32> -> vector<32x128xf32>
    %9 = vector.extract_strided_slice %3 {offsets = [0, 1, 0], sizes = [2, 16, 64], strides = [1, 1, 1]} : vector<2x18x64xf32> to vector<2x16x64xf32>
    %10 = vector.shape_cast %9 : vector<2x16x64xf32> to vector<32x64xf32>
    %11 = arith.truncf %10 : vector<32x64xf32> to vector<32x64xbf16>
    %c0_4 = arith.constant 0 : index
    %c0_5 = arith.constant 0 : index
    %12 = vector.load %arg2[%c0_4, %c0_5] : memref<64x128xbf16, #tpu.memory_space<vmem>>, vector<64x128xbf16>
    %cst_6 = arith.constant dense<0.000000e+00> : vector<32x128xf32>
    %13 = tpu.matmul %11, %12, %cst_6 {dimension_numbers = #tpu.dot_dimension_numbers<[1], [0], [0], [1], [0, 0, 1, 1], [], []>} : vector<32x64xbf16>, vector<64x128xbf16>, vector<32x128xf32> -> vector<32x128xf32>
    %14 = arith.addf %8, %13 : vector<32x128xf32>
    %15 = vector.extract_strided_slice %3 {offsets = [0, 2, 0], sizes = [2, 16, 64], strides = [1, 1, 1]} : vector<2x18x64xf32> to vector<2x16x64xf32>
    %16 = vector.shape_cast %15 : vector<2x16x64xf32> to vector<32x64xf32>
    %17 = arith.truncf %16 : vector<32x64xf32> to vector<32x64xbf16>
    %c0_7 = arith.constant 0 : index
    %c0_8 = arith.constant 0 : index
    %18 = vector.load %arg3[%c0_7, %c0_8] : memref<64x128xbf16, #tpu.memory_space<vmem>>, vector<64x128xbf16>
    %cst_9 = arith.constant dense<0.000000e+00> : vector<32x128xf32>
    %19 = tpu.matmul %17, %18, %cst_9 {dimension_numbers = #tpu.dot_dimension_numbers<[1], [0], [0], [1], [0, 0, 1, 1], [], []>} : vector<32x64xbf16>, vector<64x128xbf16>, vector<32x128xf32> -> vector<32x128xf32>
    %20 = arith.addf %14, %19 : vector<32x128xf32>
    %cst_10 = arith.constant dense<0.000000e+00> : vector<128xf32>
    %21 = vector.multi_reduction <add>, %20, %cst_10 [0] : vector<32x128xf32> to vector<128xf32>
    %22 = vector.shape_cast %21 : vector<128xf32> to vector<1x128xf32>
    %cst_11 = arith.constant 3.200000e+01 : f32
    %23 = vector.broadcast %cst_11 : f32 to vector<1x128xf32>
    %24 = arith.divf %22, %23 : vector<1x128xf32>
    %c0_12 = arith.constant 0 : index
    %c0_13 = arith.constant 0 : index
    %25 = vector.load %arg4[%c0_12, %c0_13] : memref<128x128xf32, #tpu.memory_space<vmem>>, vector<128x128xf32>
    %cst_14 = arith.constant dense<0.000000e+00> : vector<1x128xf32>
    %26 = tpu.matmul %24, %25, %cst_14 {dimension_numbers = #tpu.dot_dimension_numbers<[1], [0], [0], [1], [0, 0, 1, 1], [], []>} : vector<1x128xf32>, vector<128x128xf32>, vector<1x128xf32> -> vector<1x128xf32>
    %27 = vector.broadcast %26 : vector<1x128xf32> to vector<32x128xf32>
    %28 = arith.subf %20, %27 : vector<32x128xf32>
    %29 = arith.mulf %28, %28 : vector<32x128xf32>
    %cst_15 = arith.constant dense<0.000000e+00> : vector<128xf32>
    %30 = vector.multi_reduction <add>, %29, %cst_15 [0] : vector<32x128xf32> to vector<128xf32>
    %31 = vector.shape_cast %30 : vector<128xf32> to vector<1x128xf32>
    %cst_16 = arith.constant 3.200000e+01 : f32
    %32 = vector.broadcast %cst_16 : f32 to vector<1x128xf32>
    %33 = arith.divf %31, %32 : vector<1x128xf32>
    %c0_17 = arith.constant 0 : index
    %c0_18 = arith.constant 0 : index
    %34 = vector.load %arg4[%c0_17, %c0_18] : memref<128x128xf32, #tpu.memory_space<vmem>>, vector<128x128xf32>
    %cst_19 = arith.constant dense<0.000000e+00> : vector<1x128xf32>
    %35 = tpu.matmul %33, %34, %cst_19 {dimension_numbers = #tpu.dot_dimension_numbers<[1], [0], [0], [1], [0, 0, 1, 1], [], []>} : vector<1x128xf32>, vector<128x128xf32>, vector<1x128xf32> -> vector<1x128xf32>
    %c0_20 = arith.constant 0 : index
    %c0_21 = arith.constant 0 : index
    %36 = vector.load %arg5[%c0_20, %c0_21] : memref<1x128xf32, #tpu.memory_space<vmem>>, vector<1x128xf32>
    %cst_22 = arith.constant 9.99999974E-6 : f32
    %37 = vector.broadcast %cst_22 : f32 to vector<1x128xf32>
    %38 = arith.addf %35, %37 : vector<1x128xf32>
    %39 = math.rsqrt %38 : vector<1x128xf32>
    %40 = arith.mulf %36, %39 : vector<1x128xf32>
    %c0_23 = arith.constant 0 : index
    %c0_24 = arith.constant 0 : index
    %41 = vector.load %arg6[%c0_23, %c0_24] : memref<1x128xf32, #tpu.memory_space<vmem>>, vector<1x128xf32>
    %42 = arith.mulf %26, %40 : vector<1x128xf32>
    %43 = arith.subf %41, %42 : vector<1x128xf32>
    %44 = vector.broadcast %40 : vector<1x128xf32> to vector<32x128xf32>
    %45 = arith.mulf %20, %44 : vector<32x128xf32>
    %46 = vector.broadcast %43 : vector<1x128xf32> to vector<32x128xf32>
    %47 = arith.addf %45, %46 : vector<32x128xf32>
    %cst_25 = arith.constant 0.000000e+00 : f32
    %48 = vector.broadcast %cst_25 : f32 to vector<32x128xf32>
    %49 = arith.maximumf %47, %48 : vector<32x128xf32>
    %50 = vector.shape_cast %49 : vector<32x128xf32> to vector<2x16x128xf32>
    %51 = vector.extract_strided_slice %50 {offsets = [0, 1, 0], sizes = [2, 1, 128], strides = [1, 1, 1]} : vector<2x16x128xf32> to vector<2x1x128xf32>
    %52 = vector.extract_strided_slice %50 {offsets = [0, 14, 0], sizes = [2, 1, 128], strides = [1, 1, 1]} : vector<2x16x128xf32> to vector<2x1x128xf32>
    %53 = tpu.concatenate %51, %50, %52 in 1 : vector<2x1x128xf32>, vector<2x16x128xf32>, vector<2x1x128xf32> -> vector<2x18x128xf32>
    %54 = vector.extract_strided_slice %53 {offsets = [0, 0, 0], sizes = [2, 16, 128], strides = [1, 1, 1]} : vector<2x18x128xf32> to vector<2x16x128xf32>
    %55 = vector.shape_cast %54 : vector<2x16x128xf32> to vector<32x128xf32>
    %56 = arith.truncf %55 : vector<32x128xf32> to vector<32x128xbf16>
    %c0_26 = arith.constant 0 : index
    %c0_27 = arith.constant 0 : index
    %57 = vector.load %arg7[%c0_26, %c0_27] : memref<128x128xbf16, #tpu.memory_space<vmem>>, vector<128x128xbf16>
    %cst_28 = arith.constant dense<0.000000e+00> : vector<32x128xf32>
    %58 = tpu.matmul %56, %57, %cst_28 {dimension_numbers = #tpu.dot_dimension_numbers<[1], [0], [0], [1], [0, 0, 1, 1], [], []>} : vector<32x128xbf16>, vector<128x128xbf16>, vector<32x128xf32> -> vector<32x128xf32>
    %59 = vector.extract_strided_slice %53 {offsets = [0, 1, 0], sizes = [2, 16, 128], strides = [1, 1, 1]} : vector<2x18x128xf32> to vector<2x16x128xf32>
    %60 = vector.shape_cast %59 : vector<2x16x128xf32> to vector<32x128xf32>
    %61 = arith.truncf %60 : vector<32x128xf32> to vector<32x128xbf16>
    %c0_29 = arith.constant 0 : index
    %c0_30 = arith.constant 0 : index
    %62 = vector.load %arg8[%c0_29, %c0_30] : memref<128x128xbf16, #tpu.memory_space<vmem>>, vector<128x128xbf16>
    %cst_31 = arith.constant dense<0.000000e+00> : vector<32x128xf32>
    %63 = tpu.matmul %61, %62, %cst_31 {dimension_numbers = #tpu.dot_dimension_numbers<[1], [0], [0], [1], [0, 0, 1, 1], [], []>} : vector<32x128xbf16>, vector<128x128xbf16>, vector<32x128xf32> -> vector<32x128xf32>
    %64 = arith.addf %58, %63 : vector<32x128xf32>
    %65 = vector.extract_strided_slice %53 {offsets = [0, 2, 0], sizes = [2, 16, 128], strides = [1, 1, 1]} : vector<2x18x128xf32> to vector<2x16x128xf32>
    %66 = vector.shape_cast %65 : vector<2x16x128xf32> to vector<32x128xf32>
    %67 = arith.truncf %66 : vector<32x128xf32> to vector<32x128xbf16>
    %c0_32 = arith.constant 0 : index
    %c0_33 = arith.constant 0 : index
    %68 = vector.load %arg9[%c0_32, %c0_33] : memref<128x128xbf16, #tpu.memory_space<vmem>>, vector<128x128xbf16>
    %cst_34 = arith.constant dense<0.000000e+00> : vector<32x128xf32>
    %69 = tpu.matmul %67, %68, %cst_34 {dimension_numbers = #tpu.dot_dimension_numbers<[1], [0], [0], [1], [0, 0, 1, 1], [], []>} : vector<32x128xbf16>, vector<128x128xbf16>, vector<32x128xf32> -> vector<32x128xf32>
    %70 = arith.addf %64, %69 : vector<32x128xf32>
    %cst_35 = arith.constant dense<0.000000e+00> : vector<128xf32>
    %71 = vector.multi_reduction <add>, %70, %cst_35 [0] : vector<32x128xf32> to vector<128xf32>
    %72 = vector.shape_cast %71 : vector<128xf32> to vector<1x128xf32>
    %cst_36 = arith.constant 3.200000e+01 : f32
    %73 = vector.broadcast %cst_36 : f32 to vector<1x128xf32>
    %74 = arith.divf %72, %73 : vector<1x128xf32>
    %c0_37 = arith.constant 0 : index
    %c0_38 = arith.constant 0 : index
    %75 = vector.load %arg10[%c0_37, %c0_38] : memref<128x128xf32, #tpu.memory_space<vmem>>, vector<128x128xf32>
    %cst_39 = arith.constant dense<0.000000e+00> : vector<1x128xf32>
    %76 = tpu.matmul %74, %75, %cst_39 {dimension_numbers = #tpu.dot_dimension_numbers<[1], [0], [0], [1], [0, 0, 1, 1], [], []>} : vector<1x128xf32>, vector<128x128xf32>, vector<1x128xf32> -> vector<1x128xf32>
    %77 = vector.broadcast %76 : vector<1x128xf32> to vector<32x128xf32>
    %78 = arith.subf %70, %77 : vector<32x128xf32>
    %79 = arith.mulf %78, %78 : vector<32x128xf32>
    %cst_40 = arith.constant dense<0.000000e+00> : vector<128xf32>
    %80 = vector.multi_reduction <add>, %79, %cst_40 [0] : vector<32x128xf32> to vector<128xf32>
    %81 = vector.shape_cast %80 : vector<128xf32> to vector<1x128xf32>
    %cst_41 = arith.constant 3.200000e+01 : f32
    %82 = vector.broadcast %cst_41 : f32 to vector<1x128xf32>
    %83 = arith.divf %81, %82 : vector<1x128xf32>
    %c0_42 = arith.constant 0 : index
    %c0_43 = arith.constant 0 : index
    %84 = vector.load %arg10[%c0_42, %c0_43] : memref<128x128xf32, #tpu.memory_space<vmem>>, vector<128x128xf32>
    %cst_44 = arith.constant dense<0.000000e+00> : vector<1x128xf32>
    %85 = tpu.matmul %83, %84, %cst_44 {dimension_numbers = #tpu.dot_dimension_numbers<[1], [0], [0], [1], [0, 0, 1, 1], [], []>} : vector<1x128xf32>, vector<128x128xf32>, vector<1x128xf32> -> vector<1x128xf32>
    %c0_45 = arith.constant 0 : index
    %c0_46 = arith.constant 0 : index
    %86 = vector.load %arg11[%c0_45, %c0_46] : memref<1x128xf32, #tpu.memory_space<vmem>>, vector<1x128xf32>
    %cst_47 = arith.constant 9.99999974E-6 : f32
    %87 = vector.broadcast %cst_47 : f32 to vector<1x128xf32>
    %88 = arith.addf %85, %87 : vector<1x128xf32>
    %89 = math.rsqrt %88 : vector<1x128xf32>
    %90 = arith.mulf %86, %89 : vector<1x128xf32>
    %c0_48 = arith.constant 0 : index
    %c0_49 = arith.constant 0 : index
    %91 = vector.load %arg12[%c0_48, %c0_49] : memref<1x128xf32, #tpu.memory_space<vmem>>, vector<1x128xf32>
    %92 = arith.mulf %76, %90 : vector<1x128xf32>
    %93 = arith.subf %91, %92 : vector<1x128xf32>
    %94 = vector.broadcast %90 : vector<1x128xf32> to vector<32x128xf32>
    %95 = arith.mulf %70, %94 : vector<32x128xf32>
    %96 = vector.broadcast %93 : vector<1x128xf32> to vector<32x128xf32>
    %97 = arith.addf %95, %96 : vector<32x128xf32>
    %cst_50 = arith.constant 0.000000e+00 : f32
    %98 = vector.broadcast %cst_50 : f32 to vector<32x128xf32>
    %99 = arith.maximumf %97, %98 : vector<32x128xf32>
    %c0_51 = arith.constant 0 : index
    %c0_52 = arith.constant 0 : index
    %100 = vector.load %arg13[%c0_51, %c0_52] : memref<32x128xf32, #tpu.memory_space<vmem>>, vector<32x128xf32>
    tpu.vector_store %arg13[%c0_51, %c0_52], %99 {strides = array<i32>} : memref<32x128xf32, #tpu.memory_space<vmem>>, vector<32x128xf32>,
    return
  }
}

</mosaic_0001>

<llo_original>
// kernel: tpu_custom_call.1
$region0: #{tpu_custom_call.1}
  #allocation0 [shape = 'u32[]', space=smem, size = 0x4, offset = 0x4, fixed_abs, tag = 'smem constant byte address 0x4 - core index']
  #allocation1 [shape = 'u32[144,128]{1,0:T(1,128)}', space=vmem, size = 0x12000, scoped, tag = 'internal scratch']
  %s0 = inlined_call_operand.hbm [shape: f32[2,16,64], index: 0, kind: input, shape index: {}]
  %s1 = inlined_call_operand.hbm [shape: bf16[64,128], index: 1, kind: input, shape index: {}]
  %s2 = inlined_call_operand.hbm [shape: bf16[64,128], index: 2, kind: input, shape index: {}]
  %s3 = inlined_call_operand.hbm [shape: bf16[64,128], index: 3, kind: input, shape index: {}]
  %s4 = inlined_call_operand.hbm [shape: f32[128,128], index: 4, kind: input, shape index: {}]
  %s5 = inlined_call_operand.vmem [shape: f32[1,128], index: 5, kind: input, shape index: {}]
  %s6 = inlined_call_operand.vmem [shape: f32[1,128], index: 6, kind: input, shape index: {}]
  %s7 = inlined_call_operand.hbm [shape: bf16[128,128], index: 7, kind: input, shape index: {}]
  %s8 = inlined_call_operand.hbm [shape: bf16[128,128], index: 8, kind: input, shape index: {}]
  %s9 = inlined_call_operand.hbm [shape: bf16[128,128], index: 9, kind: input, shape index: {}]
  %s10 = inlined_call_operand.hbm [shape: f32[128,128], index: 10, kind: input, shape index: {}]
  %s11 = inlined_call_operand.vmem [shape: f32[1,128], index: 11, kind: input, shape index: {}]
  %s12 = inlined_call_operand.vmem [shape: f32[1,128], index: 12, kind: input, shape index: {}]
  %s13 = inlined_call_operand.hbm [shape: f32[32,128], index: 13, kind: output, shape index: {}]
  %s14 = sld [smem:[#allocation0]]
  $region98: #{tpu_custom_call.1} parent=0
    _
  %s16 = ssub.s32 1, %s14
  %s17 = scalar_select 0, %s16, %s14
  $region1: #{tpu_custom_call.1} parent=0
    #allocation2 [shape = 'u8[16384]{0}', space=vmem, size = 0x4000, scoped, tag = 'input window, operand 0, single buffered']
    #allocation3 [shape = 's32[1]{0}', space=sflag, size = 0x4, scoped, tag = 'scoped memory for tpu_custom_call.1']
    #allocation4 [shape = 's32[1]{0}', space=sflag, size = 0x4, scoped, tag = 'scoped memory for tpu_custom_call.1']
    #allocation5 [shape = 'u8[16384]{0}', space=vmem, size = 0x4000, scoped, tag = 'input window, operand 1, single buffered']
    #allocation6 [shape = 's32[1]{0}', space=sflag, size = 0x4, scoped, tag = 'scoped memory for tpu_custom_call.1']
    #allocation7 [shape = 'u8[16384]{0}', space=vmem, size = 0x4000, scoped, tag = 'input window, operand 2, single buffered']
    #allocation8 [shape = 'u8[16384]{0}', space=vmem, size = 0x4000, scoped, tag = 'input window, operand 3, single buffered']
    #allocation9 [shape = 's32[1]{0}', space=sflag, size = 0x4, scoped, tag = 'scoped memory for tpu_custom_call.1']
    #allocation10 [shape = 'u8[65536]{0}', space=vmem, size = 0x10000, scoped, tag = 'input window, operand 4, single buffered']
    #allocation11 [shape = 'u8[32768]{0}', space=vmem, size = 0x8000, scoped, tag = 'input window, operand 7, single buffered']
    #allocation12 [shape = 's32[1]{0}', space=sflag, size = 0x4, scoped, tag = 'scoped memory for tpu_custom_call.1']
    #allocation13 [shape = 'u8[32768]{0}', space=vmem, size = 0x8000, scoped, tag = 'input window, operand 8, single buffered']
    #allocation14 [shape = 'u8[32768]{0}', space=vmem, size = 0x8000, scoped, tag = 'input window, operand 9, single buffered']
    #allocation15 [shape = 's32[1]{0}', space=sflag, size = 0x4, scoped, tag = 'scoped memory for tpu_custom_call.1']
    #allocation16 [shape = 'u8[65536]{0}', space=vmem, size = 0x10000, scoped, tag = 'input window, operand 10, single buffered']
    #allocation17 [shape = 'u8[16384]{0}', space=vmem, size = 0x4000, scoped, tag = 'output window, operand 0, single buffered']
    %18 = vsyncpa [#allocation3], 0
    %19 = vsyncpa [#allocation6], 0
    %20 = vsyncpa [#allocation9], 0
    %21 = vsyncpa [#allocation12], 0
    %22 = vsyncpa [#allocation15], 0
    %23 = vsyncpa [#allocation4], 0
    // Predicated region
    $region2: #{tpu_custom_call.1} parent=1 // pred_check
      _
    $region3: #{tpu_custom_call.1} parent=1 // pred_check_branch
      %25 = sbr.rel (0) target = $region5
    $region4: #{tpu_custom_call.1} parent=1 // pred_region
      %s27 = ssub.s32 512, 512
      %28 = vsyncadd [#allocation3], %s27
      %s29 = sshll.u32 [#allocation2], 4
      %s30 = int_to_ptr.vmem [resolvable:$true] %s29
      %35 = dma.hbm_to_vmem [thread:$0]  %s0, 512, %s30, [#allocation3], 128, 128, 8
    $region5: #{tpu_custom_call.1} parent=1 // pred_fallthru
      _
    // Predicated region
    $region6: #{tpu_custom_call.1} parent=1 // pred_check
      _
    $region7: #{tpu_custom_call.1} parent=1 // pred_check_branch
      %37 = sbr.rel (0) target = $region9
    $region8: #{tpu_custom_call.1} parent=1 // pred_region
      %s39 = ssub.s32 512, 512
      %40 = vsyncadd [#allocation6], %s39
      %s41 = sshll.u32 [#allocation5], 4
      %s42 = int_to_ptr.vmem [resolvable:$true] %s41
      %47 = dma.hbm_to_vmem [thread:$0]  %s1, 512, %s42, [#allocation6], 64, 64, 4
    $region9: #{tpu_custom_call.1} parent=1 // pred_fallthru
      _
    // Predicated region
    $region10: #{tpu_custom_call.1} parent=1 // pred_check
      _
    $region11: #{tpu_custom_call.1} parent=1 // pred_check_branch
      %49 = sbr.rel (0) target = $region13
    $region12: #{tpu_custom_call.1} parent=1 // pred_region
      %s51 = ssub.s32 512, 512
      %52 = vsyncadd [#allocation6], %s51
      %s53 = sshll.u32 [#allocation7], 4
      %s54 = int_to_ptr.vmem [resolvable:$true] %s53
      %59 = dma.hbm_to_vmem [thread:$0]  %s2, 512, %s54, [#allocation6], 64, 64, 4
    $region13: #{tpu_custom_call.1} parent=1 // pred_fallthru
      _
    // Predicated region
    $region14: #{tpu_custom_call.1} parent=1 // pred_check
      _
    $region15: #{tpu_custom_call.1} parent=1 // pred_check_branch
      %61 = sbr.rel (0) target = $region17
    $region16: #{tpu_custom_call.1} parent=1 // pred_region
      %s63 = ssub.s32 512, 512
      %64 = vsyncadd [#allocation9], %s63
      %s65 = sshll.u32 [#allocation8], 4
      %s66 = int_to_ptr.vmem [resolvable:$true] %s65
      %71 = dma.hbm_to_vmem [thread:$0]  %s3, 512, %s66, [#allocation9], 64, 64, 4
    $region17: #{tpu_custom_call.1} parent=1 // pred_fallthru
      _
    // Predicated region
    $region18: #{tpu_custom_call.1} parent=1 // pred_check
      _
    $region19: #{tpu_custom_call.1} parent=1 // pred_check_branch
      %73 = sbr.rel (0) target = $region21
    $region20: #{tpu_custom_call.1} parent=1 // pred_region
      %s75 = ssub.s32 2048, 2048
      %76 = vsyncadd [#allocation9], %s75
      %s77 = sshll.u32 [#allocation10], 4
      %s78 = int_to_ptr.vmem [resolvable:$true] %s77
      %83 = dma.hbm_to_vmem [thread:$0]  %s4, 2048, %s78, [#allocation9], 128, 128, 8
    $region21: #{tpu_custom_call.1} parent=1 // pred_fallthru
      _
    // Predicated region
    $region22: #{tpu_custom_call.1} parent=1 // pred_check
      _
    $region23: #{tpu_custom_call.1} parent=1 // pred_check_branch
      %85 = sbr.rel (0) target = $region25
    $region24: #{tpu_custom_call.1} parent=1 // pred_region
      _
    $region25: #{tpu_custom_call.1} parent=1 // pred_fallthru
      _
    // Predicated region
    $region26: #{tpu_custom_call.1} parent=1 // pred_check
      _
    $region27: #{tpu_custom_call.1} parent=1 // pred_check_branch
      %87 = sbr.rel (0) target = $region29
    $region28: #{tpu_custom_call.1} parent=1 // pred_region
      _
    $region29: #{tpu_custom_call.1} parent=1 // pred_fallthru
      _
    // Predicated region
    $region30: #{tpu_custom_call.1} parent=1 // pred_check
      _
    $region31: #{tpu_custom_call.1} parent=1 // pred_check_branch
      %89 = sbr.rel (0) target = $region33
    $region32: #{tpu_custom_call.1} parent=1 // pred_region
      %s91 = ssub.s32 1024, 1024
      %92 = vsyncadd [#allocation12], %s91
      %s93 = sshll.u32 [#allocation11], 4
      %s94 = int_to_ptr.vmem [resolvable:$true] %s93
      %99 = dma.hbm_to_vmem [thread:$0]  %s7, 1024, %s94, [#allocation12], 64, 64, 4
    $region33: #{tpu_custom_call.1} parent=1 // pred_fallthru
      _
    // Predicated region
    $region34: #{tpu_custom_call.1} parent=1 // pred_check
      _
    $region35: #{tpu_custom_call.1} parent=1 // pred_check_branch
      %101 = sbr.rel (0) target = $region37
    $region36: #{tpu_custom_call.1} parent=1 // pred_region
      %s103 = ssub.s32 1024, 1024
      %104 = vsyncadd [#allocation12], %s103
      %s105 = sshll.u32 [#allocation13], 4
      %s106 = int_to_ptr.vmem [resolvable:$true] %s105
      %111 = dma.hbm_to_vmem [thread:$0]  %s8, 1024, %s106, [#allocation12], 64, 64, 4
    $region37: #{tpu_custom_call.1} parent=1 // pred_fallthru
      _
    // Predicated region
    $region38: #{tpu_custom_call.1} parent=1 // pred_check
      _
    $region39: #{tpu_custom_call.1} parent=1 // pred_check_branch
      %113 = sbr.rel (0) target = $region41
    $region40: #{tpu_custom_call.1} parent=1 // pred_region
      %s115 = ssub.s32 1024, 1024
      %116 = vsyncadd [#allocation15], %s115
      %s117 = sshll.u32 [#allocation14], 4
      %s118 = int_to_ptr.vmem [resolvable:$true] %s117
      %123 = dma.hbm_to_vmem [thread:$0]  %s9, 1024, %s118, [#allocation15], 64, 64, 4
    $region41: #{tpu_custom_call.1} parent=1 // pred_fallthru
      _
    // Predicated region
    $region42: #{tpu_custom_call.1} parent=1 // pred_check
      _
    $region43: #{tpu_custom_call.1} parent=1 // pred_check_branch
      %125 = sbr.rel (0) target = $region45
    $region44: #{tpu_custom_call.1} parent=1 // pred_region
      %s127 = ssub.s32 2048, 2048
      %128 = vsyncadd [#allocation15], %s127
      %s129 = sshll.u32 [#allocation16], 4
      %s130 = int_to_ptr.vmem [resolvable:$true] %s129
      %135 = dma.hbm_to_vmem [thread:$0]  %s10, 2048, %s130, [#allocation15], 128, 128, 8
    $region45: #{tpu_custom_call.1} parent=1 // pred_fallthru
      _
    // Predicated region
    $region46: #{tpu_custom_call.1} parent=1 // pred_check
      _
    $region47: #{tpu_custom_call.1} parent=1 // pred_check_branch
      %137 = sbr.rel (0) target = $region49
    $region48: #{tpu_custom_call.1} parent=1 // pred_region
      _
    $region49: #{tpu_custom_call.1} parent=1 // pred_fallthru
      _
    // Predicated region
    $region50: #{tpu_custom_call.1} parent=1 // pred_check
      _
    $region51: #{tpu_custom_call.1} parent=1 // pred_check_branch
      %139 = sbr.rel (0) target = $region53
    $region52: #{tpu_custom_call.1} parent=1 // pred_region
      _
    $region53: #{tpu_custom_call.1} parent=1 // pred_fallthru
      _
    // Predicated region
    $region54: #{tpu_custom_call.1} parent=1 // pred_check
      _
    $region55: #{tpu_custom_call.1} parent=1 // pred_check_branch
      %141 = sbr.rel (0) target = $region57
    $region56: #{tpu_custom_call.1} parent=1 // pred_region
      %142 = dma.done [#allocation3], 512
    $region57: #{tpu_custom_call.1} parent=1 // pred_fallthru
      _
    // Predicated region
    $region58: #{tpu_custom_call.1} parent=1 // pred_check
      _
    $region59: #{tpu_custom_call.1} parent=1 // pred_check_branch
      %144 = sbr.rel (0) target = $region61
    $region60: #{tpu_custom_call.1} parent=1 // pred_region
      %145 = dma.done [#allocation6], 512
    $region61: #{tpu_custom_call.1} parent=1 // pred_fallthru
      _
    // Predicated region
    $region62: #{tpu_custom_call.1} parent=1 // pred_check
      _
    $region63: #{tpu_custom_call.1} parent=1 // pred_check_branch
      %147 = sbr.rel (0) target = $region65
    $region64: #{tpu_custom_call.1} parent=1 // pred_region
      %148 = dma.done [#allocation6], 512
    $region65: #{tpu_custom_call.1} parent=1 // pred_fallthru
      _
    // Predicated region
    $region66: #{tpu_custom_call.1} parent=1 // pred_check
      _
    $region67: #{tpu_custom_call.1} parent=1 // pred_check_branch
      %150 = sbr.rel (0) target = $region69
    $region68: #{tpu_custom_call.1} parent=1 // pred_region
      %151 = dma.done [#allocation9], 512
    $region69: #{tpu_custom_call.1} parent=1 // pred_fallthru
      _
    // Predicated region
    $region70: #{tpu_custom_call.1} parent=1 // pred_check
      _
    $region71: #{tpu_custom_call.1} parent=1 // pred_check_branch
      %153 = sbr.rel (0) target = $region73
    $region72: #{tpu_custom_call.1} parent=1 // pred_region
      %154 = dma.done [#allocation9], 2048
    $region73: #{tpu_custom_call.1} parent=1 // pred_fallthru
      _
    // Predicated region
    $region74: #{tpu_custom_call.1} parent=1 // pred_check
      _
    $region75: #{tpu_custom_call.1} parent=1 // pred_check_branch
      %156 = sbr.rel (0) target = $region77
    $region76: #{tpu_custom_call.1} parent=1 // pred_region
      %157 = dma.done [#allocation12], 1024
    $region77: #{tpu_custom_call.1} parent=1 // pred_fallthru
      _
    // Predicated region
    $region78: #{tpu_custom_call.1} parent=1 // pred_check
      _
    $region79: #{tpu_custom_call.1} parent=1 // pred_check_branch
      %159 = sbr.rel (0) target = $region81
    $region80: #{tpu_custom_call.1} parent=1 // pred_region
      %160 = dma.done [#allocation12], 1024
    $region81: #{tpu_custom_call.1} parent=1 // pred_fallthru
      _
    // Predicated region
    $region82: #{tpu_custom_call.1} parent=1 // pred_check
      _
    $region83: #{tpu_custom_call.1} parent=1 // pred_check_branch
      %162 = sbr.rel (0) target = $region85
    $region84: #{tpu_custom_call.1} parent=1 // pred_region
      %163 = dma.done [#allocation15], 1024
    $region85: #{tpu_custom_call.1} parent=1 // pred_fallthru
      _
    // Predicated region
    $region86: #{tpu_custom_call.1} parent=1 // pred_check
      _
    $region87: #{tpu_custom_call.1} parent=1 // pred_check_branch
      %165 = sbr.rel (0) target = $region89
    $region88: #{tpu_custom_call.1} parent=1 // pred_region
      %166 = dma.done [#allocation15], 2048
    $region89: #{tpu_custom_call.1} parent=1 // pred_fallthru
      _
    %v168 = vld [vmem:[#allocation2] sm:$0xff]
    %v169 = vld [vmem:[#allocation2 + $0x8] sm:$0xff]
    %v170 = vld [vmem:[#allocation2 + $0x10] sm:$0xff]
    %v171 = vld [vmem:[#allocation2 + $0x18] sm:$0xff]
    %v174 = vrot.slane %v168, 1
    %v175 = vrot.slane %v170, 1
    %vm180 = vcmask 1040384
    %v181 = vrot.slane %v168, 7
    %v182 = vrot.slane %v169, 7
    %v183 = vsel %vm180, %v181, %v182
    %v184 = vrot.slane %v170, 7
    %v185 = vrot.slane %v171, 7
    %v186 = vsel %vm180, %v184, %v185
    %v193 = vrot.slane %v169, 5
    %v194 = vrot.slane %v171, 5
    %v197 = vsel %vm180, %v174, %v181
    %v198 = vsel %vm180, %v175, %v184
    %v199 = vsel %vm180, %v182, %v193
    %v200 = vsel %vm180, %v185, %v194
    %v201 = vpack.c.bf16 %v183, %v197
    %v202 = vpack.c.bf16 %v186, %v198
    %v203 = vld [vmem:[#allocation5] sm:$0xf]
    %v204 = vld [vmem:[#allocation5 + $0x4] sm:$0xf]
    %v205 = vld [vmem:[#allocation5 + $0x8] sm:$0xf]
    %v206 = vld [vmem:[#allocation5 + $0xc] sm:$0xf]
    %v207 = vld [vmem:[#allocation5 + $0x10] sm:$0xf]
    %v208 = vld [vmem:[#allocation5 + $0x14] sm:$0xf]
    %v209 = vld [vmem:[#allocation5 + $0x18] sm:$0xf]
    %v210 = vld [vmem:[#allocation5 + $0x1c] sm:$0xf]
    %vm215 = vcmask 1046528
    %v216 = vrot.slane %v197, 1
    %v217 = vrot.slane %v183, 1
    %v218 = vsel %vm215, %v216, %v217
    %v219 = vrot.slane %v199, 1
    %v220 = vsel %vm215, %v217, %v219
    %v221 = vrot.slane %v198, 1
    %v222 = vrot.slane %v186, 1
    %v223 = vsel %vm215, %v221, %v222
    %v224 = vrot.slane %v200, 1
    %v225 = vsel %vm215, %v222, %v224
    %v230 = vpack.c.bf16 %v220, %v218
    %v231 = vpack.c.bf16 %v225, %v223
    %v232 = vld [vmem:[#allocation7] sm:$0xf]
    %v233 = vld [vmem:[#allocation7 + $0x4] sm:$0xf]
    %v234 = vld [vmem:[#allocation7 + $0x8] sm:$0xf]
    %v235 = vld [vmem:[#allocation7 + $0xc] sm:$0xf]
    %v236 = vld [vmem:[#allocation7 + $0x10] sm:$0xf]
    %v237 = vld [vmem:[#allocation7 + $0x14] sm:$0xf]
    %v238 = vld [vmem:[#allocation7 + $0x18] sm:$0xf]
    %v239 = vld [vmem:[#allocation7 + $0x1c] sm:$0xf]
    %v248 = vunpack.c.l.b16 %v232
    %v249 = vunpack.c.l.b16 %v233
    %v250 = vunpack.c.l.b16 %v234
    %v251 = vunpack.c.l.b16 %v235
    %v252 = vunpack.c.l.b16 %v236
    %v253 = vunpack.c.l.b16 %v237
    %v254 = vunpack.c.l.b16 %v238
    %v255 = vunpack.c.l.b16 %v239
    %v256 = vpack.c.b16 %v249, %v248
    %v257 = vpack.c.b16 %v251, %v250
    %v258 = vpack.c.b16 %v253, %v252
    %v259 = vpack.c.b16 %v255, %v254
    %vm264 = vcmask 523264
    %v266 = vsel %vm264, %v230, 0
    %v269 = vsel %vm264, %v231, 0
    %271 = vmatprep.subr.bf16.mxu0 0
    %272 = vmatpush1.bf16.msra.mxu0 %v256
    %273 = vmatprep.subr.bf16.mxu0 0
    %274 = vmatpush1.bf16.msra.mxu0 %v257
    %275 = vmatprep.subr.bf16.mxu0 0
    %276 = vmatpush1.bf16.msra.mxu0 %v258
    %277 = vmatprep.subr.bf16.mxu0 0
    %278 = vmatpush1.bf16.msra.mxu0 %v259
    %279 = vmatprep.subr.bf16.mxu0 0
    %280 = vmatpush1.bf16.msra.mxu0 0
    %281 = vmatprep.subr.bf16.mxu0 0
    %282 = vmatpush1.bf16.msra.mxu0 0
    %283 = vmatprep.subr.bf16.mxu0 0
    %284 = vmatpush1.bf16.msra.mxu0 0
    %285 = vmatprep.subr.bf16.mxu0 0
    %286 = vmatpush1.bf16.msra.mxu0 0
    %287 = vmatprep.subr.bf16.mxu0 0
    %288 = vmatpush1.bf16.msra.mxu0 0
    %289 = vmatprep.subr.bf16.mxu0 0
    %290 = vmatpush1.bf16.msra.mxu0 0
    %291 = vmatprep.subr.bf16.mxu0 0
    %292 = vmatpush1.bf16.msra.mxu0 0
    %293 = vmatprep.subr.bf16.mxu0 0
    %294 = vmatpush1.bf16.msra.mxu0 0
    %295 = vmatprep.subr.bf16.mxu0 0
    %296 = vmatpush1.bf16.msra.mxu0 0
    %297 = vmatprep.subr.bf16.mxu0 0
    %298 = vmatpush1.bf16.msra.mxu0 0
    %299 = vmatprep.subr.bf16.mxu0 0
    %300 = vmatpush1.bf16.msra.mxu0 0
    %301 = vmatprep.subr.bf16.mxu0 0
    %302 = vmatpush1.bf16.msra.mxu0 0
    %303 = vmatprep.mubr.bf16.mxu0 0
    %304 = vmatmul.mubr.bf16.gmra.mrb[0].mxu0 %v266
    %v305 = vpop.f32.mrb[0].mxu0
    %v306 = vadd.f32 0.0, %v305
    %v307 = vpop.f32.mrb[0].mxu0
    %v308 = vpop.f32.mrb[0].mxu0
    %v309 = vadd.f32 0.0, %v308
    %v310 = vpop.f32.mrb[0].mxu0
    %311 = vmatprep.mubr.bf16.mxu0 0
    %312 = vmatmul.mubr.bf16.gmra.mrb[0].mxu0 %v269
    %v313 = vpop.f32.mrb[0].mxu0
    %v314 = vadd.f32 0.0, %v313
    %v315 = vpop.f32.mrb[0].mxu0
    %v316 = vpop.f32.mrb[0].mxu0
    %v317 = vadd.f32 0.0, %v316
    %v318 = vpop.f32.mrb[0].mxu0
    %319 = vdwg.mxu0
    %v328 = vunpack.c.l.b16 %v203
    %v329 = vunpack.c.l.b16 %v204
    %v330 = vunpack.c.l.b16 %v205
    %v331 = vunpack.c.l.b16 %v206
    %v332 = vunpack.c.l.b16 %v207
    %v333 = vunpack.c.l.b16 %v208
    %v334 = vunpack.c.l.b16 %v209
    %v335 = vunpack.c.l.b16 %v210
    %v336 = vpack.c.b16 %v329, %v328
    %v337 = vpack.c.b16 %v331, %v330
    %v338 = vpack.c.b16 %v333, %v332
    %v339 = vpack.c.b16 %v335, %v334
    %v345 = vsel %vm264, %v201, 0
    %v348 = vsel %vm264, %v202, 0
    %350 = vmatprep.subr.bf16.mxu0 0
    %351 = vmatpush1.bf16.msra.mxu0 %v336
    %352 = vmatprep.subr.bf16.mxu0 0
    %353 = vmatpush1.bf16.msra.mxu0 %v337
    %354 = vmatprep.subr.bf16.mxu0 0
    %355 = vmatpush1.bf16.msra.mxu0 %v338
    %356 = vmatprep.subr.bf16.mxu0 0
    %357 = vmatpush1.bf16.msra.mxu0 %v339
    %358 = vmatprep.subr.bf16.mxu0 0
    %359 = vmatpush1.bf16.msra.mxu0 0
    %360 = vmatprep.subr.bf16.mxu0 0
    %361 = vmatpush1.bf16.msra.mxu0 0
    %362 = vmatprep.subr.bf16.mxu0 0
    %363 = vmatpush1.bf16.msra.mxu0 0
    %364 = vmatprep.subr.bf16.mxu0 0
    %365 = vmatpush1.bf16.msra.mxu0 0
    %366 = vmatprep.subr.bf16.mxu0 0
    %367 = vmatpush1.bf16.msra.mxu0 0
    %368 = vmatprep.subr.bf16.mxu0 0
    %369 = vmatpush1.bf16.msra.mxu0 0
    %370 = vmatprep.subr.bf16.mxu0 0
    %371 = vmatpush1.bf16.msra.mxu0 0
    %372 = vmatprep.subr.bf16.mxu0 0
    %373 = vmatpush1.bf16.msra.mxu0 0
    %374 = vmatprep.subr.bf16.mxu0 0
    %375 = vmatpush1.bf16.msra.mxu0 0
    %376 = vmatprep.subr.bf16.mxu0 0
    %377 = vmatpush1.bf16.msra.mxu0 0
    %378 = vmatprep.subr.bf16.mxu0 0
    %379 = vmatpush1.bf16.msra.mxu0 0
    %380 = vmatprep.subr.bf16.mxu0 0
    %381 = vmatpush1.bf16.msra.mxu0 0
    %382 = vmatprep.mubr.bf16.mxu0 0
    %383 = vmatmul.mubr.bf16.gmra.mrb[0].mxu0 %v345
    %v384 = vpop.f32.mrb[0].mxu0
    %v385 = vadd.f32 %v306, %v384
    %v386 = vpop.f32.mrb[0].mxu0
    %v387 = vpop.f32.mrb[0].mxu0
    %v388 = vadd.f32 %v309, %v387
    %v389 = vpop.f32.mrb[0].mxu0
    %390 = vmatprep.mubr.bf16.mxu0 0
    %391 = vmatmul.mubr.bf16.gmra.mrb[0].mxu0 %v348
    %v392 = vpop.f32.mrb[0].mxu0
    %v393 = vadd.f32 %v314, %v392
    %v394 = vpop.f32.mrb[0].mxu0
    %v395 = vpop.f32.mrb[0].mxu0
    %v396 = vadd.f32 %v317, %v395
    %v397 = vpop.f32.mrb[0].mxu0
    %398 = vdwg.mxu0
    %vm399 = vcmask 1045504
    %v400 = vrot.slane %v197, 2
    %v401 = vrot.slane %v183, 2
    %v402 = vsel %vm399, %v400, %v401
    %v403 = vrot.slane %v199, 2
    %v404 = vsel %vm399, %v401, %v403
    %v405 = vrot.slane %v198, 2
    %v406 = vrot.slane %v186, 2
    %v407 = vsel %vm399, %v405, %v406
    %v408 = vrot.slane %v200, 2
    %v409 = vsel %vm399, %v406, %v408
    %v414 = vpack.c.bf16 %v404, %v402
    %v415 = vpack.c.bf16 %v409, %v407
    %v416 = vld [vmem:[#allocation8] sm:$0xf]
    %v417 = vld [vmem:[#allocation8 + $0x4] sm:$0xf]
    %v418 = vld [vmem:[#allocation8 + $0x8] sm:$0xf]
    %v419 = vld [vmem:[#allocation8 + $0xc] sm:$0xf]
    %v420 = vld [vmem:[#allocation8 + $0x10] sm:$0xf]
    %v421 = vld [vmem:[#allocation8 + $0x14] sm:$0xf]
    %v422 = vld [vmem:[#allocation8 + $0x18] sm:$0xf]
    %v423 = vld [vmem:[#allocation8 + $0x1c] sm:$0xf]
    %v432 = vunpack.c.l.b16 %v416
    %v433 = vunpack.c.l.b16 %v417
    %v434 = vunpack.c.l.b16 %v418
    %v435 = vunpack.c.l.b16 %v419
    %v436 = vunpack.c.l.b16 %v420
    %v437 = vunpack.c.l.b16 %v421
    %v438 = vunpack.c.l.b16 %v422
    %v439 = vunpack.c.l.b16 %v423
    %v440 = vpack.c.b16 %v433, %v432
    %v441 = vpack.c.b16 %v435, %v434
    %v442 = vpack.c.b16 %v437, %v436
    %v443 = vpack.c.b16 %v439, %v438
    %v449 = vsel %vm264, %v414, 0
    %v452 = vsel %vm264, %v415, 0
    %454 = vmatprep.subr.bf16.mxu0 0
    %455 = vmatpush1.bf16.msra.mxu0 %v440
    %456 = vmatprep.subr.bf16.mxu0 0
    %457 = vmatpush1.bf16.msra.mxu0 %v441
    %458 = vmatprep.subr.bf16.mxu0 0
    %459 = vmatpush1.bf16.msra.mxu0 %v442
    %460 = vmatprep.subr.bf16.mxu0 0
    %461 = vmatpush1.bf16.msra.mxu0 %v443
    %462 = vmatprep.subr.bf16.mxu0 0
    %463 = vmatpush1.bf16.msra.mxu0 0
    %464 = vmatprep.subr.bf16.mxu0 0
    %465 = vmatpush1.bf16.msra.mxu0 0
    %466 = vmatprep.subr.bf16.mxu0 0
    %467 = vmatpush1.bf16.msra.mxu0 0
    %468 = vmatprep.subr.bf16.mxu0 0
    %469 = vmatpush1.bf16.msra.mxu0 0
    %470 = vmatprep.subr.bf16.mxu0 0
    %471 = vmatpush1.bf16.msra.mxu0 0
    %472 = vmatprep.subr.bf16.mxu0 0
    %473 = vmatpush1.bf16.msra.mxu0 0
    %474 = vmatprep.subr.bf16.mxu0 0
    %475 = vmatpush1.bf16.msra.mxu0 0
    %476 = vmatprep.subr.bf16.mxu0 0
    %477 = vmatpush1.bf16.msra.mxu0 0
    %478 = vmatprep.subr.bf16.mxu0 0
    %479 = vmatpush1.bf16.msra.mxu0 0
    %480 = vmatprep.subr.bf16.mxu0 0
    %481 = vmatpush1.bf16.msra.mxu0 0
    %482 = vmatprep.subr.bf16.mxu0 0
    %483 = vmatpush1.bf16.msra.mxu0 0
    %484 = vmatprep.subr.bf16.mxu0 0
    %485 = vmatpush1.bf16.msra.mxu0 0
    %486 = vmatprep.mubr.bf16.mxu0 0
    %487 = vmatmul.mubr.bf16.gmra.mrb[0].mxu0 %v449
    %v488 = vpop.f32.mrb[0].mxu0
    %v489 = vadd.f32 0.0, %v488
    %v490 = vpop.f32.mrb[0].mxu0
    %v491 = vpop.f32.mrb[0].mxu0
    %v492 = vadd.f32 0.0, %v491
    %v493 = vpop.f32.mrb[0].mxu0
    %494 = vmatprep.mubr.bf16.mxu0 0
    %495 = vmatmul.mubr.bf16.gmra.mrb[0].mxu0 %v452
    %v496 = vpop.f32.mrb[0].mxu0
    %v497 = vadd.f32 0.0, %v496
    %v498 = vpop.f32.mrb[0].mxu0
    %v499 = vpop.f32.mrb[0].mxu0
    %v500 = vadd.f32 0.0, %v499
    %v501 = vpop.f32.mrb[0].mxu0
    %502 = vdwg.mxu0
    %v503 = vadd.f32 %v385, %v489
    %v504 = vadd.f32 %v388, %v492
    %v505 = vadd.f32 %v393, %v497
    %v506 = vadd.f32 %v396, %v500
    %v507 = vadd.f32 %v503, %v504
    %v508 = vadd.f32 %v507, %v505
    %v509 = vadd.f32 %v508, %v506
    %v510 = vrot.slane %v509, 4
    %v511 = vadd.f32 %v509, %v510
    %v512 = vrot.slane %v511, 2
    %v513 = vadd.f32 %v511, %v512
    %v514 = vrot.slane %v513, 1
    %v515 = vadd.f32 %v513, %v514
    %v516 = vrcp.pop 32.0
    %v517 = vmul.f32 %v515, %v516
    %v518 = vld [vmem:[#allocation10] sm:$0xff]
    %v519 = vld [vmem:[#allocation10 + $0x8] sm:$0xff]
    %v520 = vld [vmem:[#allocation10 + $0x10] sm:$0xff]
    %v521 = vld [vmem:[#allocation10 + $0x18] sm:$0xff]
    %v522 = vld [vmem:[#allocation10 + $0x20] sm:$0xff]
    %v523 = vld [vmem:[#allocation10 + $0x28] sm:$0xff]
    %v524 = vld [vmem:[#allocation10 + $0x30] sm:$0xff]
    %v525 = vld [vmem:[#allocation10 + $0x38] sm:$0xff]
    %v526 = vld [vmem:[#allocation10 + $0x40] sm:$0xff]
    %v527 = vld [vmem:[#allocation10 + $0x48] sm:$0xff]
    %v528 = vld [vmem:[#allocation10 + $0x50] sm:$0xff]
    %v529 = vld [vmem:[#allocation10 + $0x58] sm:$0xff]
    %v530 = vld [vmem:[#allocation10 + $0x60] sm:$0xff]
    %v531 = vld [vmem:[#allocation10 + $0x68] sm:$0xff]
    %v532 = vld [vmem:[#allocation10 + $0x70] sm:$0xff]
    %v533 = vld [vmem:[#allocation10 + $0x78] sm:$0xff]
    %534 = vmatprep.subr.mxu0 0.0
    %535 = vmatpush1.msra.mxu0 %v518
    %536 = vmatprep.subr.mxu0 0.0
    %537 = vmatpush1.msra.mxu0 %v519
    %538 = vmatprep.subr.mxu0 0.0
    %539 = vmatpush1.msra.mxu0 %v520
    %540 = vmatprep.subr.mxu0 0.0
    %541 = vmatpush1.msra.mxu0 %v521
    %542 = vmatprep.subr.mxu0 0.0
    %543 = vmatpush1.msra.mxu0 %v522
    %544 = vmatprep.subr.mxu0 0.0
    %545 = vmatpush1.msra.mxu0 %v523
    %546 = vmatprep.subr.mxu0 0.0
    %547 = vmatpush1.msra.mxu0 %v524
    %548 = vmatprep.subr.mxu0 0.0
    %549 = vmatpush1.msra.mxu0 %v525
    %550 = vmatprep.subr.mxu0 0.0
    %551 = vmatpush1.msra.mxu0 %v526
    %552 = vmatprep.subr.mxu0 0.0
    %553 = vmatpush1.msra.mxu0 %v527
    %554 = vmatprep.subr.mxu0 0.0
    %555 = vmatpush1.msra.mxu0 %v528
    %556 = vmatprep.subr.mxu0 0.0
    %557 = vmatpush1.msra.mxu0 %v529
    %558 = vmatprep.subr.mxu0 0.0
    %559 = vmatpush1.msra.mxu0 %v530
    %560 = vmatprep.subr.mxu0 0.0
    %561 = vmatpush1.msra.mxu0 %v531
    %562 = vmatprep.subr.mxu0 0.0
    %563 = vmatpush1.msra.mxu0 %v532
    %564 = vmatprep.subr.mxu0 0.0
    %565 = vmatpush1.msra.mxu0 %v533
    %566 = vmatprep.subr.mxu0 0.0
    %567 = vmatpush1.msra.mxu0 0.0
    %568 = vmatprep.subr.mxu0 0.0
    %569 = vmatpush1.msra.mxu0 0.0
    %570 = vmatprep.subr.mxu0 0.0
    %571 = vmatpush1.msra.mxu0 0.0
    %572 = vmatprep.subr.mxu0 0.0
    %573 = vmatpush1.msra.mxu0 0.0
    %574 = vmatprep.subr.mxu0 0.0
    %575 = vmatpush1.msra.mxu0 0.0
    %576 = vmatprep.subr.mxu0 0.0
    %577 = vmatpush1.msra.mxu0 0.0
    %578 = vmatprep.subr.mxu0 0.0
    %579 = vmatpush1.msra.mxu0 0.0
    %580 = vmatprep.subr.mxu0 0.0
    %581 = vmatpush1.msra.mxu0 0.0
    %582 = vmatprep.subr.mxu0 0.0
    %583 = vmatpush1.msra.mxu0 0.0
    %584 = vmatprep.subr.mxu0 0.0
    %585 = vmatpush1.msra.mxu0 0.0
    %586 = vmatprep.subr.mxu0 0.0
    %587 = vmatpush1.msra.mxu0 0.0
    %588 = vmatprep.subr.mxu0 0.0
    %589 = vmatpush1.msra.mxu0 0.0
    %590 = vmatprep.subr.mxu0 0.0
    %591 = vmatpush1.msra.mxu0 0.0
    %592 = vmatprep.subr.mxu0 0.0
    %593 = vmatpush1.msra.mxu0 0.0
    %594 = vmatprep.subr.mxu0 0.0
    %595 = vmatpush1.msra.mxu0 0.0
    %596 = vmatprep.subr.mxu0 0.0
    %597 = vmatpush1.msra.mxu0 0.0
    %598 = vmatprep.mubr.f32.mxu0 0.0
    %599 = vmatmul.mubr.f32.gmra.mrb[0].mxu0 %v517
    %v600 = vpop.f32.mrb[0].mxu0
    %v601 = vadd.f32 0.0, %v600
    %v602 = vpop.f32.mrb[0].mxu0
    %603 = vdwg.mxu0
    %v604 = vlaneseq
    %v605 = vshrl.u32 %v604, 7
    %v606 = vsub.s32 0, %v605
    %v607 = vrot.slane %v601, %v606
    %v608 = vsub.f32 %v503, %v607
    %v609 = vsub.f32 %v504, %v607
    %v610 = vsub.f32 %v505, %v607
    %v611 = vsub.f32 %v506, %v607
    %v612 = vmul.f32 %v608, %v608
    %v613 = vmul.f32 %v609, %v609
    %v614 = vmul.f32 %v610, %v610
    %v615 = vmul.f32 %v611, %v611
    %v616 = vadd.f32 %v612, %v613
    %v617 = vadd.f32 %v616, %v614
    %v618 = vadd.f32 %v617, %v615
    %v619 = vrot.slane %v618, 4
    %v620 = vadd.f32 %v618, %v619
    %v621 = vrot.slane %v620, 2
    %v622 = vadd.f32 %v620, %v621
    %v623 = vrot.slane %v622, 1
    %v624 = vadd.f32 %v622, %v623
    %v625 = vmul.f32 %v624, %v516
    %v626 = vld [vmem:[%s5] sm:$0x1]
    %627 = vmatprep.subr.mxu0 0.0
    %628 = vmatpush1.msra.mxu0 %v518
    %629 = vmatprep.subr.mxu0 0.0
    %630 = vmatpush1.msra.mxu0 %v519
    %631 = vmatprep.subr.mxu0 0.0
    %632 = vmatpush1.msra.mxu0 %v520
    %633 = vmatprep.subr.mxu0 0.0
    %634 = vmatpush1.msra.mxu0 %v521
    %635 = vmatprep.subr.mxu0 0.0
    %636 = vmatpush1.msra.mxu0 %v522
    %637 = vmatprep.subr.mxu0 0.0
    %638 = vmatpush1.msra.mxu0 %v523
    %639 = vmatprep.subr.mxu0 0.0
    %640 = vmatpush1.msra.mxu0 %v524
    %641 = vmatprep.subr.mxu0 0.0
    %642 = vmatpush1.msra.mxu0 %v525
    %643 = vmatprep.subr.mxu0 0.0
    %644 = vmatpush1.msra.mxu0 %v526
    %645 = vmatprep.subr.mxu0 0.0
    %646 = vmatpush1.msra.mxu0 %v527
    %647 = vmatprep.subr.mxu0 0.0
    %648 = vmatpush1.msra.mxu0 %v528
    %649 = vmatprep.subr.mxu0 0.0
    %650 = vmatpush1.msra.mxu0 %v529
    %651 = vmatprep.subr.mxu0 0.0
    %652 = vmatpush1.msra.mxu0 %v530
    %653 = vmatprep.subr.mxu0 0.0
    %654 = vmatpush1.msra.mxu0 %v531
    %655 = vmatprep.subr.mxu0 0.0
    %656 = vmatpush1.msra.mxu0 %v532
    %657 = vmatprep.subr.mxu0 0.0
    %658 = vmatpush1.msra.mxu0 %v533
    %659 = vmatprep.subr.mxu0 0.0
    %660 = vmatpush1.msra.mxu0 0.0
    %661 = vmatprep.subr.mxu0 0.0
    %662 = vmatpush1.msra.mxu0 0.0
    %663 = vmatprep.subr.mxu0 0.0
    %664 = vmatpush1.msra.mxu0 0.0
    %665 = vmatprep.subr.mxu0 0.0
    %666 = vmatpush1.msra.mxu0 0.0
    %667 = vmatprep.subr.mxu0 0.0
    %668 = vmatpush1.msra.mxu0 0.0
    %669 = vmatprep.subr.mxu0 0.0
    %670 = vmatpush1.msra.mxu0 0.0
    %671 = vmatprep.subr.mxu0 0.0
    %672 = vmatpush1.msra.mxu0 0.0
    %673 = vmatprep.subr.mxu0 0.0
    %674 = vmatpush1.msra.mxu0 0.0
    %675 = vmatprep.subr.mxu0 0.0
    %676 = vmatpush1.msra.mxu0 0.0
    %677 = vmatprep.subr.mxu0 0.0
    %678 = vmatpush1.msra.mxu0 0.0
    %679 = vmatprep.subr.mxu0 0.0
    %680 = vmatpush1.msra.mxu0 0.0
    %681 = vmatprep.subr.mxu0 0.0
    %682 = vmatpush1.msra.mxu0 0.0
    %683 = vmatprep.subr.mxu0 0.0
    %684 = vmatpush1.msra.mxu0 0.0
    %685 = vmatprep.subr.mxu0 0.0
    %686 = vmatpush1.msra.mxu0 0.0
    %687 = vmatprep.subr.mxu0 0.0
    %688 = vmatpush1.msra.mxu0 0.0
    %689 = vmatprep.subr.mxu0 0.0
    %690 = vmatpush1.msra.mxu0 0.0
    %691 = vmatprep.mubr.f32.mxu0 0.0
    %692 = vmatmul.mubr.f32.gmra.mrb[0].mxu0 %v625
    %v693 = vpop.f32.mrb[0].mxu0
    %v694 = vadd.f32 1e-05, %v693
    %v695 = vpop.f32.mrb[0].mxu0
    %696 = vdwg.mxu0
    %v697 = vrsqrt.pop %v694
    %v698 = vmul.f32 %v626, %v697
    %v699 = vld [vmem:[%s6] sm:$0x1]
    %v700 = vmul.f32 %v601, %v698
    %v701 = vsub.f32 %v699, %v700
    %v703 = vlaneseq
    %v704 = vshrl.u32 %v703, 7
    %v705 = vsub.s32 0, %v704
    %v706 = vrot.slane %v698, %v705
    %v708 = vmul.f32 %v503, %v706
    %v709 = vmul.f32 %v504, %v706
    %v710 = vmul.f32 %v505, %v706
    %v711 = vmul.f32 %v506, %v706
    %v713 = vlaneseq
    %v714 = vshrl.u32 %v713, 7
    %v715 = vsub.s32 0, %v714
    %v716 = vrot.slane %v701, %v715
    %v718 = vadd.f32 %v708, %v716
    %v719 = vadd.f32 %v709, %v716
    %v720 = vadd.f32 %v710, %v716
    %v721 = vadd.f32 %v711, %v716
    %v722 = vmax.f32 %v718, 0.0
    %v723 = vmax.f32 %v719, 0.0
    %v724 = vmax.f32 %v720, 0.0
    %v725 = vmax.f32 %v721, 0.0
    %v728 = vrot.slane %v722, 1
    %v729 = vrot.slane %v724, 1
    %v734 = vrot.slane %v722, 7
    %v735 = vrot.slane %v723, 7
    %v736 = vsel %vm180, %v734, %v735
    %v737 = vrot.slane %v724, 7
    %v738 = vrot.slane %v725, 7
    %v739 = vsel %vm180, %v737, %v738
    %v746 = vrot.slane %v723, 5
    %v747 = vrot.slane %v725, 5
    %v750 = vsel %vm180, %v728, %v734
    %v751 = vsel %vm180, %v729, %v737
    %v752 = vsel %vm180, %v735, %v746
    %v753 = vsel %vm180, %v738, %v747
    %v754 = vpack.c.bf16 %v736, %v750
    %v755 = vpack.c.bf16 %v739, %v751
    %v756 = vld [vmem:[#allocation11] sm:$0xf]
    %v757 = vld [vmem:[#allocation11 + $0x4] sm:$0xf]
    %v758 = vld [vmem:[#allocation11 + $0x8] sm:$0xf]
    %v759 = vld [vmem:[#allocation11 + $0xc] sm:$0xf]
    %v760 = vld [vmem:[#allocation11 + $0x10] sm:$0xf]
    %v761 = vld [vmem:[#allocation11 + $0x14] sm:$0xf]
    %v762 = vld [vmem:[#allocation11 + $0x18] sm:$0xf]
    %v763 = vld [vmem:[#allocation11 + $0x1c] sm:$0xf]
    %v764 = vld [vmem:[#allocation11 + $0x20] sm:$0xf]
    %v765 = vld [vmem:[#allocation11 + $0x24] sm:$0xf]
    %v766 = vld [vmem:[#allocation11 + $0x28] sm:$0xf]
    %v767 = vld [vmem:[#allocation11 + $0x2c] sm:$0xf]
    %v768 = vld [vmem:[#allocation11 + $0x30] sm:$0xf]
    %v769 = vld [vmem:[#allocation11 + $0x34] sm:$0xf]
    %v770 = vld [vmem:[#allocation11 + $0x38] sm:$0xf]
    %v771 = vld [vmem:[#allocation11 + $0x3c] sm:$0xf]
    %v776 = vrot.slane %v750, 1
    %v777 = vrot.slane %v736, 1
    %v778 = vsel %vm215, %v776, %v777
    %v779 = vrot.slane %v752, 1
    %v780 = vsel %vm215, %v777, %v779
    %v781 = vrot.slane %v751, 1
    %v782 = vrot.slane %v739, 1
    %v783 = vsel %vm215, %v781, %v782
    %v784 = vrot.slane %v753, 1
    %v785 = vsel %vm215, %v782, %v784
    %v790 = vpack.c.bf16 %v780, %v778
    %v791 = vpack.c.bf16 %v785, %v783
    %v792 = vld [vmem:[#allocation13] sm:$0xf]
    %v793 = vld [vmem:[#allocation13 + $0x4] sm:$0xf]
    %v794 = vld [vmem:[#allocation13 + $0x8] sm:$0xf]
    %v795 = vld [vmem:[#allocation13 + $0xc] sm:$0xf]
    %v796 = vld [vmem:[#allocation13 + $0x10] sm:$0xf]
    %v797 = vld [vmem:[#allocation13 + $0x14] sm:$0xf]
    %v798 = vld [vmem:[#allocation13 + $0x18] sm:$0xf]
    %v799 = vld [vmem:[#allocation13 + $0x1c] sm:$0xf]
    %v800 = vld [vmem:[#allocation13 + $0x20] sm:$0xf]
    %v801 = vld [vmem:[#allocation13 + $0x24] sm:$0xf]
    %v802 = vld [vmem:[#allocation13 + $0x28] sm:$0xf]
    %v803 = vld [vmem:[#allocation13 + $0x2c] sm:$0xf]
    %v804 = vld [vmem:[#allocation13 + $0x30] sm:$0xf]
    %v805 = vld [vmem:[#allocation13 + $0x34] sm:$0xf]
    %v806 = vld [vmem:[#allocation13 + $0x38] sm:$0xf]
    %v807 = vld [vmem:[#allocation13 + $0x3c] sm:$0xf]
    %v824 = vunpack.c.l.b16 %v792
    %v825 = vunpack.c.l.b16 %v793
    %v826 = vunpack.c.l.b16 %v794
    %v827 = vunpack.c.l.b16 %v795
    %v828 = vunpack.c.l.b16 %v796
    %v829 = vunpack.c.l.b16 %v797
    %v830 = vunpack.c.l.b16 %v798
    %v831 = vunpack.c.l.b16 %v799
    %v832 = vunpack.c.l.b16 %v800
    %v833 = vunpack.c.l.b16 %v801
    %v834 = vunpack.c.l.b16 %v802
    %v835 = vunpack.c.l.b16 %v803
    %v836 = vunpack.c.l.b16 %v804
    %v837 = vunpack.c.l.b16 %v805
    %v838 = vunpack.c.l.b16 %v806
    %v839 = vunpack.c.l.b16 %v807
    %v840 = vpack.c.b16 %v825, %v824
    %v841 = vpack.c.b16 %v827, %v826
    %v842 = vpack.c.b16 %v829, %v828
    %v843 = vpack.c.b16 %v831, %v830
    %v844 = vpack.c.b16 %v833, %v832
    %v845 = vpack.c.b16 %v835, %v834
    %v846 = vpack.c.b16 %v837, %v836
    %v847 = vpack.c.b16 %v839, %v838
    %856 = vmatprep.subr.bf16.mxu0 0
    %857 = vmatpush1.bf16.msra.mxu0 %v840
    %858 = vmatprep.subr.bf16.mxu0 0
    %859 = vmatpush1.bf16.msra.mxu0 %v841
    %860 = vmatprep.subr.bf16.mxu0 0
    %861 = vmatpush1.bf16.msra.mxu0 %v842
    %862 = vmatprep.subr.bf16.mxu0 0
    %863 = vmatpush1.bf16.msra.mxu0 %v843
    %864 = vmatprep.subr.bf16.mxu0 0
    %865 = vmatpush1.bf16.msra.mxu0 %v844
    %866 = vmatprep.subr.bf16.mxu0 0
    %867 = vmatpush1.bf16.msra.mxu0 %v845
    %868 = vmatprep.subr.bf16.mxu0 0
    %869 = vmatpush1.bf16.msra.mxu0 %v846
    %870 = vmatprep.subr.bf16.mxu0 0
    %871 = vmatpush1.bf16.msra.mxu0 %v847
    %872 = vmatprep.subr.bf16.mxu0 0
    %873 = vmatpush1.bf16.msra.mxu0 0
    %874 = vmatprep.subr.bf16.mxu0 0
    %875 = vmatpush1.bf16.msra.mxu0 0
    %876 = vmatprep.subr.bf16.mxu0 0
    %877 = vmatpush1.bf16.msra.mxu0 0
    %878 = vmatprep.subr.bf16.mxu0 0
    %879 = vmatpush1.bf16.msra.mxu0 0
    %880 = vmatprep.subr.bf16.mxu0 0
    %881 = vmatpush1.bf16.msra.mxu0 0
    %882 = vmatprep.subr.bf16.mxu0 0
    %883 = vmatpush1.bf16.msra.mxu0 0
    %884 = vmatprep.subr.bf16.mxu0 0
    %885 = vmatpush1.bf16.msra.mxu0 0
    %886 = vmatprep.subr.bf16.mxu0 0
    %887 = vmatpush1.bf16.msra.mxu0 0
    %888 = vmatprep.mubr.bf16.mxu0 0
    %889 = vmatmul.mubr.bf16.gmra.mrb[0].mxu0 %v790
    %v890 = vpop.f32.mrb[0].mxu0
    %v891 = vadd.f32 0.0, %v890
    %v892 = vpop.f32.mrb[0].mxu0
    %v893 = vpop.f32.mrb[0].mxu0
    %v894 = vadd.f32 0.0, %v893
    %v895 = vpop.f32.mrb[0].mxu0
    %896 = vmatprep.mubr.bf16.mxu0 0
    %897 = vmatmul.mubr.bf16.gmra.mrb[0].mxu0 %v791
    %v898 = vpop.f32.mrb[0].mxu0
    %v899 = vadd.f32 0.0, %v898
    %v900 = vpop.f32.mrb[0].mxu0
    %v901 = vpop.f32.mrb[0].mxu0
    %v902 = vadd.f32 0.0, %v901
    %v903 = vpop.f32.mrb[0].mxu0
    %904 = vdwg.mxu0
    %v921 = vunpack.c.l.b16 %v756
    %v922 = vunpack.c.l.b16 %v757
    %v923 = vunpack.c.l.b16 %v758
    %v924 = vunpack.c.l.b16 %v759
    %v925 = vunpack.c.l.b16 %v760
    %v926 = vunpack.c.l.b16 %v761
    %v927 = vunpack.c.l.b16 %v762
    %v928 = vunpack.c.l.b16 %v763
    %v929 = vunpack.c.l.b16 %v764
    %v930 = vunpack.c.l.b16 %v765
    %v931 = vunpack.c.l.b16 %v766
    %v932 = vunpack.c.l.b16 %v767
    %v933 = vunpack.c.l.b16 %v768
    %v934 = vunpack.c.l.b16 %v769
    %v935 = vunpack.c.l.b16 %v770
    %v936 = vunpack.c.l.b16 %v771
    %v937 = vpack.c.b16 %v922, %v921
    %v938 = vpack.c.b16 %v924, %v923
    %v939 = vpack.c.b16 %v926, %v925
    %v940 = vpack.c.b16 %v928, %v927
    %v941 = vpack.c.b16 %v930, %v929
    %v942 = vpack.c.b16 %v932, %v931
    %v943 = vpack.c.b16 %v934, %v933
    %v944 = vpack.c.b16 %v936, %v935
    %953 = vmatprep.subr.bf16.mxu0 0
    %954 = vmatpush1.bf16.msra.mxu0 %v937
    %955 = vmatprep.subr.bf16.mxu0 0
    %956 = vmatpush1.bf16.msra.mxu0 %v938
    %957 = vmatprep.subr.bf16.mxu0 0
    %958 = vmatpush1.bf16.msra.mxu0 %v939
    %959 = vmatprep.subr.bf16.mxu0 0
    %960 = vmatpush1.bf16.msra.mxu0 %v940
    %961 = vmatprep.subr.bf16.mxu0 0
    %962 = vmatpush1.bf16.msra.mxu0 %v941
    %963 = vmatprep.subr.bf16.mxu0 0
    %964 = vmatpush1.bf16.msra.mxu0 %v942
    %965 = vmatprep.subr.bf16.mxu0 0
    %966 = vmatpush1.bf16.msra.mxu0 %v943
    %967 = vmatprep.subr.bf16.mxu0 0
    %968 = vmatpush1.bf16.msra.mxu0 %v944
    %969 = vmatprep.subr.bf16.mxu0 0
    %970 = vmatpush1.bf16.msra.mxu0 0
    %971 = vmatprep.subr.bf16.mxu0 0
    %972 = vmatpush1.bf16.msra.mxu0 0
    %973 = vmatprep.subr.bf16.mxu0 0
    %974 = vmatpush1.bf16.msra.mxu0 0
    %975 = vmatprep.subr.bf16.mxu0 0
    %976 = vmatpush1.bf16.msra.mxu0 0
    %977 = vmatprep.subr.bf16.mxu0 0
    %978 = vmatpush1.bf16.msra.mxu0 0
    %979 = vmatprep.subr.bf16.mxu0 0
    %980 = vmatpush1.bf16.msra.mxu0 0
    %981 = vmatprep.subr.bf16.mxu0 0
    %982 = vmatpush1.bf16.msra.mxu0 0
    %983 = vmatprep.subr.bf16.mxu0 0
    %984 = vmatpush1.bf16.msra.mxu0 0
    %985 = vmatprep.mubr.bf16.mxu0 0
    %986 = vmatmul.mubr.bf16.gmra.mrb[0].mxu0 %v754
    %v987 = vpop.f32.mrb[0].mxu0
    %v988 = vadd.f32 %v891, %v987
    %v989 = vpop.f32.mrb[0].mxu0
    %v990 = vpop.f32.mrb[0].mxu0
    %v991 = vadd.f32 %v894, %v990
    %v992 = vpop.f32.mrb[0].mxu0
    %993 = vmatprep.mubr.bf16.mxu0 0
    %994 = vmatmul.mubr.bf16.gmra.mrb[0].mxu0 %v755
    %v995 = vpop.f32.mrb[0].mxu0
    %v996 = vadd.f32 %v899, %v995
    %v997 = vpop.f32.mrb[0].mxu0
    %v998 = vpop.f32.mrb[0].mxu0
    %v999 = vadd.f32 %v902, %v998
    %v1000 = vpop.f32.mrb[0].mxu0
    %1001 = vdwg.mxu0
    %v1002 = vrot.slane %v750, 2
    %v1003 = vrot.slane %v736, 2
    %v1004 = vsel %vm399, %v1002, %v1003
    %v1005 = vrot.slane %v752, 2
    %v1006 = vsel %vm399, %v1003, %v1005
    %v1007 = vrot.slane %v751, 2
    %v1008 = vrot.slane %v739, 2
    %v1009 = vsel %vm399, %v1007, %v1008
    %v1010 = vrot.slane %v753, 2
    %v1011 = vsel %vm399, %v1008, %v1010
    %v1016 = vpack.c.bf16 %v1006, %v1004
    %v1017 = vpack.c.bf16 %v1011, %v1009
    %v1018 = vld [vmem:[#allocation14] sm:$0xf]
    %v1019 = vld [vmem:[#allocation14 + $0x4] sm:$0xf]
    %v1020 = vld [vmem:[#allocation14 + $0x8] sm:$0xf]
    %v1021 = vld [vmem:[#allocation14 + $0xc] sm:$0xf]
    %v1022 = vld [vmem:[#allocation14 + $0x10] sm:$0xf]
    %v1023 = vld [vmem:[#allocation14 + $0x14] sm:$0xf]
    %v1024 = vld [vmem:[#allocation14 + $0x18] sm:$0xf]
    %v1025 = vld [vmem:[#allocation14 + $0x1c] sm:$0xf]
    %v1026 = vld [vmem:[#allocation14 + $0x20] sm:$0xf]
    %v1027 = vld [vmem:[#allocation14 + $0x24] sm:$0xf]
    %v1028 = vld [vmem:[#allocation14 + $0x28] sm:$0xf]
    %v1029 = vld [vmem:[#allocation14 + $0x2c] sm:$0xf]
    %v1030 = vld [vmem:[#allocation14 + $0x30] sm:$0xf]
    %v1031 = vld [vmem:[#allocation14 + $0x34] sm:$0xf]
    %v1032 = vld [vmem:[#allocation14 + $0x38] sm:$0xf]
    %v1033 = vld [vmem:[#allocation14 + $0x3c] sm:$0xf]
    %v1050 = vunpack.c.l.b16 %v1018
    %v1051 = vunpack.c.l.b16 %v1019
    %v1052 = vunpack.c.l.b16 %v1020
    %v1053 = vunpack.c.l.b16 %v1021
    %v1054 = vunpack.c.l.b16 %v1022
    %v1055 = vunpack.c.l.b16 %v1023
    %v1056 = vunpack.c.l.b16 %v1024
    %v1057 = vunpack.c.l.b16 %v1025
    %v1058 = vunpack.c.l.b16 %v1026
    %v1059 = vunpack.c.l.b16 %v1027
    %v1060 = vunpack.c.l.b16 %v1028
    %v1061 = vunpack.c.l.b16 %v1029
    %v1062 = vunpack.c.l.b16 %v1030
    %v1063 = vunpack.c.l.b16 %v1031
    %v1064 = vunpack.c.l.b16 %v1032
    %v1065 = vunpack.c.l.b16 %v1033
    %v1066 = vpack.c.b16 %v1051, %v1050
    %v1067 = vpack.c.b16 %v1053, %v1052
    %v1068 = vpack.c.b16 %v1055, %v1054
    %v1069 = vpack.c.b16 %v1057, %v1056
    %v1070 = vpack.c.b16 %v1059, %v1058
    %v1071 = vpack.c.b16 %v1061, %v1060
    %v1072 = vpack.c.b16 %v1063, %v1062
    %v1073 = vpack.c.b16 %v1065, %v1064
    %1082 = vmatprep.subr.bf16.mxu0 0
    %1083 = vmatpush1.bf16.msra.mxu0 %v1066
    %1084 = vmatprep.subr.bf16.mxu0 0
    %1085 = vmatpush1.bf16.msra.mxu0 %v1067
    %1086 = vmatprep.subr.bf16.mxu0 0
    %1087 = vmatpush1.bf16.msra.mxu0 %v1068
    %1088 = vmatprep.subr.bf16.mxu0 0
    %1089 = vmatpush1.bf16.msra.mxu0 %v1069
    %1090 = vmatprep.subr.bf16.mxu0 0
    %1091 = vmatpush1.bf16.msra.mxu0 %v1070
    %1092 = vmatprep.subr.bf16.mxu0 0
    %1093 = vmatpush1.bf16.msra.mxu0 %v1071
    %1094 = vmatprep.subr.bf16.mxu0 0
    %1095 = vmatpush1.bf16.msra.mxu0 %v1072
    %1096 = vmatprep.subr.bf16.mxu0 0
    %1097 = vmatpush1.bf16.msra.mxu0 %v1073
    %1098 = vmatprep.subr.bf16.mxu0 0
    %1099 = vmatpush1.bf16.msra.mxu0 0
    %1100 = vmatprep.subr.bf16.mxu0 0
    %1101 = vmatpush1.bf16.msra.mxu0 0
    %1102 = vmatprep.subr.bf16.mxu0 0
    %1103 = vmatpush1.bf16.msra.mxu0 0
    %1104 = vmatprep.subr.bf16.mxu0 0
    %1105 = vmatpush1.bf16.msra.mxu0 0
    %1106 = vmatprep.subr.bf16.mxu0 0
    %1107 = vmatpush1.bf16.msra.mxu0 0
    %1108 = vmatprep.subr.bf16.mxu0 0
    %1109 = vmatpush1.bf16.msra.mxu0 0
    %1110 = vmatprep.subr.bf16.mxu0 0
    %1111 = vmatpush1.bf16.msra.mxu0 0
    %1112 = vmatprep.subr.bf16.mxu0 0
    %1113 = vmatpush1.bf16.msra.mxu0 0
    %1114 = vmatprep.mubr.bf16.mxu0 0
    %1115 = vmatmul.mubr.bf16.gmra.mrb[0].mxu0 %v1016
    %v1116 = vpop.f32.mrb[0].mxu0
    %v1117 = vadd.f32 0.0, %v1116
    %v1118 = vpop.f32.mrb[0].mxu0
    %v1119 = vpop.f32.mrb[0].mxu0
    %v1120 = vadd.f32 0.0, %v1119
    %v1121 = vpop.f32.mrb[0].mxu0
    %1122 = vmatprep.mubr.bf16.mxu0 0
    %1123 = vmatmul.mubr.bf16.gmra.mrb[0].mxu0 %v1017
    %v1124 = vpop.f32.mrb[0].mxu0
    %v1125 = vadd.f32 0.0, %v1124
    %v1126 = vpop.f32.mrb[0].mxu0
    %v1127 = vpop.f32.mrb[0].mxu0
    %v1128 = vadd.f32 0.0, %v1127
    %v1129 = vpop.f32.mrb[0].mxu0
    %1130 = vdwg.mxu0
    %v1131 = vadd.f32 %v988, %v1117
    %v1132 = vadd.f32 %v991, %v1120
    %v1133 = vadd.f32 %v996, %v1125
    %v1134 = vadd.f32 %v999, %v1128
    %v1135 = vadd.f32 %v1131, %v1132
    %v1136 = vadd.f32 %v1135, %v1133
    %v1137 = vadd.f32 %v1136, %v1134
    %v1138 = vrot.slane %v1137, 4
    %v1139 = vadd.f32 %v1137, %v1138
    %v1140 = vrot.slane %v1139, 2
    %v1141 = vadd.f32 %v1139, %v1140
    %v1142 = vrot.slane %v1141, 1
    %v1143 = vadd.f32 %v1141, %v1142
    %v1144 = vmul.f32 %v1143, %v516
    %v1145 = vld [vmem:[#allocation16] sm:$0xff]
    %v1146 = vld [vmem:[#allocation16 + $0x8] sm:$0xff]
    %v1147 = vld [vmem:[#allocation16 + $0x10] sm:$0xff]
    %v1148 = vld [vmem:[#allocation16 + $0x18] sm:$0xff]
    %v1149 = vld [vmem:[#allocation16 + $0x20] sm:$0xff]
    %v1150 = vld [vmem:[#allocation16 + $0x28] sm:$0xff]
    %v1151 = vld [vmem:[#allocation16 + $0x30] sm:$0xff]
    %v1152 = vld [vmem:[#allocation16 + $0x38] sm:$0xff]
    %v1153 = vld [vmem:[#allocation16 + $0x40] sm:$0xff]
    %v1154 = vld [vmem:[#allocation16 + $0x48] sm:$0xff]
    %v1155 = vld [vmem:[#allocation16 + $0x50] sm:$0xff]
    %v1156 = vld [vmem:[#allocation16 + $0x58] sm:$0xff]
    %v1157 = vld [vmem:[#allocation16 + $0x60] sm:$0xff]
    %v1158 = vld [vmem:[#allocation16 + $0x68] sm:$0xff]
    %v1159 = vld [vmem:[#allocation16 + $0x70] sm:$0xff]
    %v1160 = vld [vmem:[#allocation16 + $0x78] sm:$0xff]
    %1161 = vmatprep.subr.mxu0 0.0
    %1162 = vmatpush1.msra.mxu0 %v1145
    %1163 = vmatprep.subr.mxu0 0.0
    %1164 = vmatpush1.msra.mxu0 %v1146
    %1165 = vmatprep.subr.mxu0 0.0
    %1166 = vmatpush1.msra.mxu0 %v1147
    %1167 = vmatprep.subr.mxu0 0.0
    %1168 = vmatpush1.msra.mxu0 %v1148
    %1169 = vmatprep.subr.mxu0 0.0
    %1170 = vmatpush1.msra.mxu0 %v1149
    %1171 = vmatprep.subr.mxu0 0.0
    %1172 = vmatpush1.msra.mxu0 %v1150
    %1173 = vmatprep.subr.mxu0 0.0
    %1174 = vmatpush1.msra.mxu0 %v1151
    %1175 = vmatprep.subr.mxu0 0.0
    %1176 = vmatpush1.msra.mxu0 %v1152
    %1177 = vmatprep.subr.mxu0 0.0
    %1178 = vmatpush1.msra.mxu0 %v1153
    %1179 = vmatprep.subr.mxu0 0.0
    %1180 = vmatpush1.msra.mxu0 %v1154
    %1181 = vmatprep.subr.mxu0 0.0
    %1182 = vmatpush1.msra.mxu0 %v1155
    %1183 = vmatprep.subr.mxu0 0.0
    %1184 = vmatpush1.msra.mxu0 %v1156
    %1185 = vmatprep.subr.mxu0 0.0
    %1186 = vmatpush1.msra.mxu0 %v1157
    %1187 = vmatprep.subr.mxu0 0.0
    %1188 = vmatpush1.msra.mxu0 %v1158
    %1189 = vmatprep.subr.mxu0 0.0
    %1190 = vmatpush1.msra.mxu0 %v1159
    %1191 = vmatprep.subr.mxu0 0.0
    %1192 = vmatpush1.msra.mxu0 %v1160
    %1193 = vmatprep.subr.mxu0 0.0
    %1194 = vmatpush1.msra.mxu0 0.0
    %1195 = vmatprep.subr.mxu0 0.0
    %1196 = vmatpush1.msra.mxu0 0.0
    %1197 = vmatprep.subr.mxu0 0.0
    %1198 = vmatpush1.msra.mxu0 0.0
    %1199 = vmatprep.subr.mxu0 0.0
    %1200 = vmatpush1.msra.mxu0 0.0
    %1201 = vmatprep.subr.mxu0 0.0
    %1202 = vmatpush1.msra.mxu0 0.0
    %1203 = vmatprep.subr.mxu0 0.0
    %1204 = vmatpush1.msra.mxu0 0.0
    %1205 = vmatprep.subr.mxu0 0.0
    %1206 = vmatpush1.msra.mxu0 0.0
    %1207 = vmatprep.subr.mxu0 0.0
    %1208 = vmatpush1.msra.mxu0 0.0
    %1209 = vmatprep.subr.mxu0 0.0
    %1210 = vmatpush1.msra.mxu0 0.0
    %1211 = vmatprep.subr.mxu0 0.0
    %1212 = vmatpush1.msra.mxu0 0.0
    %1213 = vmatprep.subr.mxu0 0.0
    %1214 = vmatpush1.msra.mxu0 0.0
    %1215 = vmatprep.subr.mxu0 0.0
    %1216 = vmatpush1.msra.mxu0 0.0
    %1217 = vmatprep.subr.mxu0 0.0
    %1218 = vmatpush1.msra.mxu0 0.0
    %1219 = vmatprep.subr.mxu0 0.0
    %1220 = vmatpush1.msra.mxu0 0.0
    %1221 = vmatprep.subr.mxu0 0.0
    %1222 = vmatpush1.msra.mxu0 0.0
    %1223 = vmatprep.subr.mxu0 0.0
    %1224 = vmatpush1.msra.mxu0 0.0
    %1225 = vmatprep.mubr.f32.mxu0 0.0
    %1226 = vmatmul.mubr.f32.gmra.mrb[0].mxu0 %v1144
    %v1227 = vpop.f32.mrb[0].mxu0
    %v1228 = vadd.f32 0.0, %v1227
    %v1229 = vpop.f32.mrb[0].mxu0
    %1230 = vdwg.mxu0
    %v1231 = vlaneseq
    %v1232 = vshrl.u32 %v1231, 7
    %v1233 = vsub.s32 0, %v1232
    %v1234 = vrot.slane %v1228, %v1233
    %v1235 = vsub.f32 %v1131, %v1234
    %v1236 = vsub.f32 %v1132, %v1234
    %v1237 = vsub.f32 %v1133, %v1234
    %v1238 = vsub.f32 %v1134, %v1234
    %v1239 = vmul.f32 %v1235, %v1235
    %v1240 = vmul.f32 %v1236, %v1236
    %v1241 = vmul.f32 %v1237, %v1237
    %v1242 = vmul.f32 %v1238, %v1238
    %v1243 = vadd.f32 %v1239, %v1240
    %v1244 = vadd.f32 %v1243, %v1241
    %v1245 = vadd.f32 %v1244, %v1242
    %v1246 = vrot.slane %v1245, 4
    %v1247 = vadd.f32 %v1245, %v1246
    %v1248 = vrot.slane %v1247, 2
    %v1249 = vadd.f32 %v1247, %v1248
    %v1250 = vrot.slane %v1249, 1
    %v1251 = vadd.f32 %v1249, %v1250
    %v1252 = vmul.f32 %v1251, %v516
    %v1253 = vld [vmem:[%s11] sm:$0x1]
    %1254 = vmatprep.subr.mxu0 0.0
    %1255 = vmatpush1.msra.mxu0 %v1145
    %1256 = vmatprep.subr.mxu0 0.0
    %1257 = vmatpush1.msra.mxu0 %v1146
    %1258 = vmatprep.subr.mxu0 0.0
    %1259 = vmatpush1.msra.mxu0 %v1147
    %1260 = vmatprep.subr.mxu0 0.0
    %1261 = vmatpush1.msra.mxu0 %v1148
    %1262 = vmatprep.subr.mxu0 0.0
    %1263 = vmatpush1.msra.mxu0 %v1149
    %1264 = vmatprep.subr.mxu0 0.0
    %1265 = vmatpush1.msra.mxu0 %v1150
    %1266 = vmatprep.subr.mxu0 0.0
    %1267 = vmatpush1.msra.mxu0 %v1151
    %1268 = vmatprep.subr.mxu0 0.0
    %1269 = vmatpush1.msra.mxu0 %v1152
    %1270 = vmatprep.subr.mxu0 0.0
    %1271 = vmatpush1.msra.mxu0 %v1153
    %1272 = vmatprep.subr.mxu0 0.0
    %1273 = vmatpush1.msra.mxu0 %v1154
    %1274 = vmatprep.subr.mxu0 0.0
    %1275 = vmatpush1.msra.mxu0 %v1155
    %1276 = vmatprep.subr.mxu0 0.0
    %1277 = vmatpush1.msra.mxu0 %v1156
    %1278 = vmatprep.subr.mxu0 0.0
    %1279 = vmatpush1.msra.mxu0 %v1157
    %1280 = vmatprep.subr.mxu0 0.0
    %1281 = vmatpush1.msra.mxu0 %v1158
    %1282 = vmatprep.subr.mxu0 0.0
    %1283 = vmatpush1.msra.mxu0 %v1159
    %1284 = vmatprep.subr.mxu0 0.0
    %1285 = vmatpush1.msra.mxu0 %v1160
    %1286 = vmatprep.subr.mxu0 0.0
    %1287 = vmatpush1.msra.mxu0 0.0
    %1288 = vmatprep.subr.mxu0 0.0
    %1289 = vmatpush1.msra.mxu0 0.0
    %1290 = vmatprep.subr.mxu0 0.0
    %1291 = vmatpush1.msra.mxu0 0.0
    %1292 = vmatprep.subr.mxu0 0.0
    %1293 = vmatpush1.msra.mxu0 0.0
    %1294 = vmatprep.subr.mxu0 0.0
    %1295 = vmatpush1.msra.mxu0 0.0
    %1296 = vmatprep.subr.mxu0 0.0
    %1297 = vmatpush1.msra.mxu0 0.0
    %1298 = vmatprep.subr.mxu0 0.0
    %1299 = vmatpush1.msra.mxu0 0.0
    %1300 = vmatprep.subr.mxu0 0.0
    %1301 = vmatpush1.msra.mxu0 0.0
    %1302 = vmatprep.subr.mxu0 0.0
    %1303 = vmatpush1.msra.mxu0 0.0
    %1304 = vmatprep.subr.mxu0 0.0
    %1305 = vmatpush1.msra.mxu0 0.0
    %1306 = vmatprep.subr.mxu0 0.0
    %1307 = vmatpush1.msra.mxu0 0.0
    %1308 = vmatprep.subr.mxu0 0.0
    %1309 = vmatpush1.msra.mxu0 0.0
    %1310 = vmatprep.subr.mxu0 0.0
    %1311 = vmatpush1.msra.mxu0 0.0
    %1312 = vmatprep.subr.mxu0 0.0
    %1313 = vmatpush1.msra.mxu0 0.0
    %1314 = vmatprep.subr.mxu0 0.0
    %1315 = vmatpush1.msra.mxu0 0.0
    %1316 = vmatprep.subr.mxu0 0.0
    %1317 = vmatpush1.msra.mxu0 0.0
    %1318 = vmatprep.mubr.f32.mxu0 0.0
    %1319 = vmatmul.mubr.f32.gmra.mrb[0].mxu0 %v1252
    %v1320 = vpop.f32.mrb[0].mxu0
    %v1321 = vadd.f32 1e-05, %v1320
    %v1322 = vpop.f32.mrb[0].mxu0
    %1323 = vdwg.mxu0
    %v1324 = vrsqrt.pop %v1321
    %v1325 = vmul.f32 %v1253, %v1324
    %v1326 = vld [vmem:[%s12] sm:$0x1]
    %v1327 = vmul.f32 %v1228, %v1325
    %v1328 = vsub.f32 %v1326, %v1327
    %v1330 = vlaneseq
    %v1331 = vshrl.u32 %v1330, 7
    %v1332 = vsub.s32 0, %v1331
    %v1333 = vrot.slane %v1325, %v1332
    %v1335 = vmul.f32 %v1131, %v1333
    %v1336 = vmul.f32 %v1132, %v1333
    %v1337 = vmul.f32 %v1133, %v1333
    %v1338 = vmul.f32 %v1134, %v1333
    %v1340 = vlaneseq
    %v1341 = vshrl.u32 %v1340, 7
    %v1342 = vsub.s32 0, %v1341
    %v1343 = vrot.slane %v1328, %v1342
    %v1345 = vadd.f32 %v1335, %v1343
    %v1346 = vadd.f32 %v1336, %v1343
    %v1347 = vadd.f32 %v1337, %v1343
    %v1348 = vadd.f32 %v1338, %v1343
    %v1349 = vmax.f32 %v1345, 0.0
    %v1350 = vmax.f32 %v1346, 0.0
    %v1351 = vmax.f32 %v1347, 0.0
    %v1352 = vmax.f32 %v1348, 0.0
    %1353 = vst [vmem:[#allocation17] sm:$0xff] %v1349
    %1354 = vst [vmem:[#allocation17 + $0x8] sm:$0xff] %v1350
    %1355 = vst [vmem:[#allocation17 + $0x10] sm:$0xff] %v1351
    %1356 = vst [vmem:[#allocation17 + $0x18] sm:$0xff] %v1352
    // Predicated region
    $region90: #{tpu_custom_call.1} parent=1 // pred_check
      _
    $region91: #{tpu_custom_call.1} parent=1 // pred_check_branch
      %1358 = sbr.rel (0) target = $region93
    $region92: #{tpu_custom_call.1} parent=1 // pred_region
      %s1360 = ssub.s32 512, 512
      %1361 = vsyncadd [#allocation4], %s1360
      %s1362 = sshll.u32 [#allocation17], 4
      %s1363 = int_to_ptr.vmem [resolvable:$true] %s1362
      %1368 = dma.vmem_to_hbm [thread:$0]  %s1363, 512, %s13, [#allocation4], 128, 128, 8
    $region93: #{tpu_custom_call.1} parent=1 // pred_fallthru
      _
    // Predicated region
    $region94: #{tpu_custom_call.1} parent=1 // pred_check
      _
    $region95: #{tpu_custom_call.1} parent=1 // pred_check_branch
      %1370 = sbr.rel (0) target = $region97
    $region96: #{tpu_custom_call.1} parent=1 // pred_region
      %1371 = dma.done [#allocation4], 512
    $region97: #{tpu_custom_call.1} parent=1 // pred_fallthru
      _
    %1372 = vsyncpa [#allocation3], 1
    %1373 = vsyncpa [#allocation6], 1
    %1374 = vsyncpa [#allocation9], 1
    %1375 = vsyncpa [#allocation12], 1
    %1376 = vsyncpa [#allocation15], 1
    %1377 = vsyncpa [#allocation4], 1

</llo_original>
